<compile_context>
chip_gen: v7x
topology: tpu7x:2x2x1
jax: 0.10.0
libtpu: 0.0.40
codegen_flags: <defaults>
</compile_context>

<pallas_src>
import functools

import jax
import jax.numpy as jnp
from jax import lax
from jax.experimental import pallas as pl
from jax.experimental.pallas import tpu as pltpu


def _probe_buffered():
    try:
        pl.BlockSpec((8, 128), lambda i: (0, 0), pipeline_mode=pl.Buffered(1))
        return True
    except Exception:
        return False


_HAS_BUFFERED = _probe_buffered()


def _layer_norm(x, gamma, beta, eps=1e-5):
    """Single-pass LayerNorm: var = E[x^2] - mu^2 (halves the cross-lane reductions)."""
    d = x.shape[-1]
    inv_d = 1.0 / float(d)
    s1 = jnp.sum(x, axis=-1, keepdims=True)
    s2 = jnp.sum(x * x, axis=-1, keepdims=True)
    mu = s1 * inv_d
    var = jnp.maximum(s2 * inv_d - mu * mu, 0.0)
    return (x - mu) * lax.rsqrt(var + eps) * gamma + beta


def encoder_layer_kernel(nhead, f_chunk, has_mask, *args):
    if has_mask:
        (src_f_ref, pos_f_ref, src_q_ref, pos_q_ref, mask_ref,
         wq_ref, bq_ref, wk_ref, bk_ref, wv_ref, bv_ref, wo_ref, bo_ref,
         w1_ref, b1_ref, w2_ref, b2_ref, g1_ref, be1_ref, g2_ref, be2_ref,
         out_ref, k_sc, v_sc, q_sc, heads_sc) = args
    else:
        mask_ref = None
        (src_f_ref, pos_f_ref, src_q_ref, pos_q_ref,
         wq_ref, bq_ref, wk_ref, bk_ref, wv_ref, bv_ref, wo_ref, bo_ref,
         w1_ref, b1_ref, w2_ref, b2_ref, g1_ref, be1_ref, g2_ref, be2_ref,
         out_ref, k_sc, v_sc, q_sc, heads_sc) = args

    S, D = src_f_ref.shape        # full sequence (batch squeezed by BlockSpec)
    tq = src_q_ref.shape[0]       # query tile
    hd = D // nhead
    F = w1_ref.shape[1]

    qi = pl.program_id(1)

    # ---- K / V projections for the whole sequence: computed once per batch step, ----
    # ---- cached in bf16 VMEM scratch and reused for every query tile.            ----
    @pl.when(qi == 0)
    def _():
        xf = src_f_ref[...]                                   # (S, D) f32
        kv_in = (xf + pos_f_ref[...]).astype(jnp.bfloat16)
        k = jnp.dot(kv_in, wk_ref[...], preferred_element_type=jnp.float32) + bk_ref[...]
        v = jnp.dot(xf.astype(jnp.bfloat16), wv_ref[...],
                    preferred_element_type=jnp.float32) + bv_ref[...]
        k_sc[...] = k.astype(jnp.bfloat16)
        v_sc[...] = v.astype(jnp.bfloat16)

    # ---- Q projection for this query tile (1/sqrt(hd) folded into Wq/bq host-side) ----
    xq = src_q_ref[...]                                        # (tq, D) f32
    q = jnp.dot((xq + pos_q_ref[...]).astype(jnp.bfloat16), wq_ref[...],
                preferred_element_type=jnp.float32) + bq_ref[...]
    q_sc[...] = q.astype(jnp.bfloat16)                         # bound live range across heads

    # ---- per-head attention; per-head outputs land in heads_sc at their lane offset ----
    contract = (((1,), (1,)), ((), ()))                        # q_h . k_h^T, no XLU transpose
    for h in range(nhead):                                     # static unrolled loop over heads
        sl = slice(h * hd, (h + 1) * hd)
        s = lax.dot_general(q_sc[:, sl], k_sc[:, sl], contract,
                            preferred_element_type=jnp.float32)        # (tq, S)
        if has_mask:
            s = s + mask_ref[...]
        s = s - jnp.max(s, axis=-1, keepdims=True)
        p = jnp.exp(s)                                          # f32 softmax math
        p = p * pl.reciprocal(jnp.sum(p, axis=-1, keepdims=True), approx=True)
        oh = jnp.dot(p.astype(jnp.bfloat16), v_sc[:, sl],
                     preferred_element_type=jnp.float32)                # (tq, hd)
        heads_sc[:, sl] = oh.astype(jnp.bfloat16)

    # ---- single large output projection over all heads (full-K MXU fill) ----
    attn = jnp.dot(heads_sc[...], wo_ref[...],
                   preferred_element_type=jnp.float32) + bo_ref[...]

    # dropout1 is identity (eval mode)
    x = xq + attn
    x = _layer_norm(x, g1_ref[...], be1_ref[...])

    # ---- feed-forward, tiled over the hidden dimension F ----
    xb = x.astype(jnp.bfloat16)
    acc = jnp.zeros((tq, D), jnp.float32)
    for f0 in range(0, F, f_chunk):                             # static loop, F known at trace
        fs = slice(f0, f0 + f_chunk)
        h1 = jnp.dot(xb, w1_ref[:, fs], preferred_element_type=jnp.float32) + b1_ref[:, fs]
        h1 = jnp.maximum(h1, 0.0)                               # relu; inner dropout identity
        acc = acc + jnp.dot(h1.astype(jnp.bfloat16), w2_ref[fs, :],
                            preferred_element_type=jnp.float32)
    # dropout2 is identity (eval mode)
    x = x + acc + b2_ref[...]
    x = _layer_norm(x, g2_ref[...], be2_ref[...])

    out_ref[...] = x


def _prepare_kernel_params(params, nhead):
    """Host-side prep: fold softmax scale into Q projection, cast matmul weights to bf16."""
    D = params["wqt"].shape[0]
    hd = D // nhead
    scale = 1.0 / float(hd) ** 0.5
    bf16, f32 = jnp.bfloat16, jnp.float32
    return dict(
        wq=(params["wqt"] * scale).astype(bf16), bq=(params["bq"] * scale).astype(f32),
        wk=params["wkt"].astype(bf16), bk=params["bk"].astype(f32),
        wv=params["wvt"].astype(bf16), bv=params["bv"].astype(f32),
        wo=params["wot"].astype(bf16), bo=params["bo"].astype(f32),
        w1=params["w1t"].astype(bf16), b1=params["b1"].astype(f32),
        w2=params["w2t"].astype(bf16), b2=params["b2"].astype(f32),
        g1=params["g1"].astype(f32), be1=params["be1"].astype(f32),
        g2=params["g2"].astype(f32), be2=params["be2"].astype(f32),
    )


def _pick_chunk(total, target):
    """Largest divisor of `total` that is <= target (or total itself if already small)."""
    if total <= target:
        return total
    for c in range(target, 0, -1):
        if total % c == 0:
            return c
    return total


def _pick_q_tile(S, target=256):
    """Query tile: divisor of S, multiple of 8 (sublane), <= target; else whole S."""
    if S <= target:
        return S
    start = target - (target % 8)
    for c in range(start, 7, -8):
        if S % c == 0:
            return c
    return S


def _vmem_limit_bytes(S, D, F, tq, f_chunk, has_mask):
    bf16, f32 = 2, 4
    weights = (4 * D * D + 2 * D * F) * bf16                     # wq, wk, wv, wo, w1, w2
    biases = (10 * D + F) * f32
    mask = (2 * tq * S * f32) if has_mask else 0                 # double-buffered mask tile
    streamed = (2 * S * D + 3 * tq * D) * f32 * 2                # full src/pos + tiles + out
    scratch = (2 * S * D + 2 * tq * D) * bf16                    # k/v + q/heads scratch
    live = (2 * tq * S + 6 * tq * D + 2 * tq * f_chunk + S * D) * f32
    est = weights + biases + mask + streamed + scratch + live
    try:
        phys = int(getattr(pltpu.get_tpu_info(), "vmem_capacity_bytes", 128 * 2 ** 20))
    except Exception:
        phys = 128 * 2 ** 20
    cap = min(int(phys * 0.8), 100 * 2 ** 20)                    # ~51 MiB on v7x, 100 MiB v5e/v6e
    return int(min(cap, max(32 * 2 ** 20, 2 * est)))


def _cost_estimate(B, S, D, F, nhead, tq):
    nq = max(1, S // tq)
    flops = B * (4 * S * D * D                                   # K, V projections (per batch)
                 + nq * (2 * tq * D * D)                         # Q projection
                 + nq * (4 * tq * S * D)                         # scores + PV over all heads
                 + nq * (2 * tq * D * D)                         # out projection
                 + nq * (4 * tq * D * F))                        # FFN
    transcendentals = B * (nhead * S * S + nhead * S + 2 * S)    # exp + recip + rsqrt
    bytes_accessed = (B * 3 * S * D * 4
                      + (4 * D * D + 2 * D * F) * 2 + (10 * D + F) * 4)
    return pl.CostEstimate(flops=int(flops), transcendentals=int(transcendentals),
                           bytes_accessed=int(bytes_accessed))


def transformer_encoder_layer(src, pos, mask, params, nhead):
    B, S, D = src.shape
    F = params["w1t"].shape[1]
    has_mask = mask is not None
    tq = _pick_q_tile(S)
    f_chunk = _pick_chunk(F, 512)
    nq = S // tq
    kp = _prepare_kernel_params(params, nhead)
    kernel = functools.partial(encoder_layer_kernel, nhead, f_chunk, has_mask)

    const_kwargs = {"pipeline_mode": pl.Buffered(1)} if _HAS_BUFFERED else {}

    def const(shape):
        nd = len(shape)
        return pl.BlockSpec(shape, lambda *_, _nd=nd: (0,) * _nd, **const_kwargs)

    full_seq = pl.BlockSpec((None, S, D), lambda b, qi: (b, 0, 0))   # squeeze batch dim
    q_tile = pl.BlockSpec((None, tq, D), lambda b, qi: (b, qi, 0))

    in_specs = [full_seq, full_seq, q_tile, q_tile]
    inputs = [src, pos, src, pos]
    if has_mask:
        in_specs.append(pl.BlockSpec((tq, S), lambda b, qi: (qi, 0)))
        inputs.append(mask)
    in_specs += [
        const((D, D)), const((1, D)),    # Wq, bq (scale folded)
        const((D, D)), const((1, D)),    # Wk, bk
        const((D, D)), const((1, D)),    # Wv, bv
        const((D, D)), const((1, D)),    # Wo, bo
        const((D, F)), const((1, F)),    # W1, b1
        const((F, D)), const((1, D)),    # W2, b2
        const((1, D)), const((1, D)),    # norm1 gamma, beta
        const((1, D)), const((1, D)),    # norm2 gamma, beta
    ]
    inputs += [kp["wq"], kp["bq"], kp["wk"], kp["bk"], kp["wv"], kp["bv"],
               kp["wo"], kp["bo"], kp["w1"], kp["b1"], kp["w2"], kp["b2"],
               kp["g1"], kp["be1"], kp["g2"], kp["be2"]]

    return pl.pallas_call(
        kernel,
        out_shape=jax.ShapeDtypeStruct((B, S, D), jnp.float32),
        grid_spec=pltpu.PrefetchScalarGridSpec(
            num_scalar_prefetch=0,
            grid=(B, nq),
            in_specs=in_specs,
            out_specs=q_tile,
            scratch_shapes=[
                pltpu.VMEM((S, D), jnp.bfloat16),    # K (full sequence)
                pltpu.VMEM((S, D), jnp.bfloat16),    # V (full sequence)
                pltpu.VMEM((tq, D), jnp.bfloat16),   # Q (query tile)
                pltpu.VMEM((tq, D), jnp.bfloat16),   # per-head outputs before out_proj
            ]),
        compiler_params=pltpu.CompilerParams(
            dimension_semantics=("parallel", "arbitrary"),
            vmem_limit_bytes=_vmem_limit_bytes(S, D, F, tq, f_chunk, has_mask)),
        cost_estimate=_cost_estimate(B, S, D, F, nhead, tq),
    )(*inputs)


def reference(src, pos, mask, p, nhead):
    """Pure-JAX reference mirroring nn.MultiheadAttention + post-norm encoder layer."""
    B, S, D = src.shape
    hd = D // nhead
    qk = src + pos
    q = qk @ p["wqt"] + p["bq"]
    k = qk @ p["wkt"] + p["bk"]
    v = src @ p["wvt"] + p["bv"]

    def heads(t):
        return t.reshape(B, S, nhead, hd).transpose(0, 2, 1, 3)

    qh, kh, vh = heads(q), heads(k), heads(v)
    s = jnp.einsum("bhqd,bhkd->bhqk", qh, kh) / jnp.sqrt(float(hd))
    if mask is not None:
        s = s + mask
    pm = jax.nn.softmax(s, axis=-1)
    o = jnp.einsum("bhqk,bhkd->bhqd", pm, vh).transpose(0, 2, 1, 3).reshape(B, S, D)
    o = o @ p["wot"] + p["bo"]
    x = src + o
    x = _layer_norm(x, p["g1"], p["be1"])
    h = jnp.maximum(x @ p["w1t"] + p["b1"], 0.0)
    x = x + (h @ p["w2t"] + p["b2"])
    x = _layer_norm(x, p["g2"], p["be2"])
    return x


if __name__ == "__main__":
    # TODO(synk): benchmark/tune at real RT-DETR shapes (D=256, nhead=8, F=1024/2048, S=H*W);
    # the demo shapes below are only a correctness check.
    B, S, D, NHEAD, DFF = 2, 8, 32, 4, 64

    key = jax.random.PRNGKey(0)
    keys = jax.random.split(key, 12)

    # Deterministic synthetic parameters (shapes follow the nn.Module __init__).
    in_proj_w = 0.05 * jax.random.normal(keys[0], (3 * D, D), jnp.float32)   # MHA in_proj_weight
    in_proj_b = 0.05 * jax.random.normal(keys[1], (3 * D,), jnp.float32)     # MHA in_proj_bias
    out_proj_w = 0.05 * jax.random.normal(keys[2], (D, D), jnp.float32)      # MHA out_proj.weight
    out_proj_b = 0.05 * jax.random.normal(keys[3], (D,), jnp.float32)
    lin1_w = 0.05 * jax.random.normal(keys[4], (DFF, D), jnp.float32)        # linear1.weight
    lin1_b = 0.05 * jax.random.normal(keys[5], (DFF,), jnp.float32)
    lin2_w = 0.05 * jax.random.normal(keys[6], (D, DFF), jnp.float32)        # linear2.weight
    lin2_b = 0.05 * jax.random.normal(keys[7], (D,), jnp.float32)

    params = {
        # attention projections, pre-transposed to (in, out); biases as (1, out)
        "wqt": in_proj_w[:D].T,        "bq": in_proj_b[:D].reshape(1, D),
        "wkt": in_proj_w[D:2 * D].T,   "bk": in_proj_b[D:2 * D].reshape(1, D),
        "wvt": in_proj_w[2 * D:].T,    "bv": in_proj_b[2 * D:].reshape(1, D),
        "wot": out_proj_w.T,           "bo": out_proj_b.reshape(1, D),
        # FFN
        "w1t": lin1_w.T, "b1": lin1_b.reshape(1, DFF),
        "w2t": lin2_w.T, "b2": lin2_b.reshape(1, D),
        # layernorms
        "g1": jnp.ones((1, D), jnp.float32), "be1": jnp.zeros((1, D), jnp.float32),
        "g2": jnp.ones((1, D), jnp.float32), "be2": jnp.zeros((1, D), jnp.float32),
    }

    src = jax.random.normal(keys[8], (B, S, D), jnp.float32)
    pos = jax.random.normal(keys[9], (B, S, D), jnp.float32)

    # Path 1: src_mask=None (common RT-DETR case) -- mask input dropped entirely.
    out = jax.block_until_ready(transformer_encoder_layer(src, pos, None, params, NHEAD))
    ref = reference(src, pos, None, params, NHEAD)
    assert out.shape == (B, S, D)
    assert bool(jnp.allclose(out, ref, rtol=5e-2, atol=5e-2)), "mismatch (mask=None)"

    # Path 2: finite additive attention mask.
    mask = -0.5 * jnp.abs(jax.random.normal(keys[10], (S, S), jnp.float32))
    out_m = jax.block_until_ready(transformer_encoder_layer(src, pos, mask, params, NHEAD))
    ref_m = reference(src, pos, mask, params, NHEAD)
    assert bool(jnp.allclose(out_m, ref_m, rtol=5e-2, atol=5e-2)), "mismatch (masked)"

    print("KERNEL_OK")
</pallas_src>

<mosaic_0001>
module attributes {stable_mosaic.version = 11 : i64} {
  func.func @encoder_layer_kernel(%arg0: i32, %arg1: i32, %arg2: memref<1x8x32xf32, #tpu.memory_space<vmem>>, %arg3: memref<1x8x32xf32, #tpu.memory_space<vmem>>, %arg4: memref<1x8x32xf32, #tpu.memory_space<vmem>>, %arg5: memref<1x8x32xf32, #tpu.memory_space<vmem>>, %arg6: memref<32x32xbf16, #tpu.memory_space<vmem>>, %arg7: memref<1x32xf32, #tpu.memory_space<vmem>>, %arg8: memref<32x32xbf16, #tpu.memory_space<vmem>>, %arg9: memref<1x32xf32, #tpu.memory_space<vmem>>, %arg10: memref<32x32xbf16, #tpu.memory_space<vmem>>, %arg11: memref<1x32xf32, #tpu.memory_space<vmem>>, %arg12: memref<32x32xbf16, #tpu.memory_space<vmem>>, %arg13: memref<1x32xf32, #tpu.memory_space<vmem>>, %arg14: memref<32x64xbf16, #tpu.memory_space<vmem>>, %arg15: memref<1x64xf32, #tpu.memory_space<vmem>>, %arg16: memref<64x32xbf16, #tpu.memory_space<vmem>>, %arg17: memref<1x32xf32, #tpu.memory_space<vmem>>, %arg18: memref<1x32xf32, #tpu.memory_space<vmem>>, %arg19: memref<1x32xf32, #tpu.memory_space<vmem>>, %arg20: memref<1x32xf32, #tpu.memory_space<vmem>>, %arg21: memref<1x32xf32, #tpu.memory_space<vmem>>, %arg22: memref<1x8x32xf32, #tpu.memory_space<vmem>>, %arg23: memref<8x32xbf16, #tpu.memory_space<vmem>>, %arg24: memref<8x32xbf16, #tpu.memory_space<vmem>>, %arg25: memref<8x32xbf16, #tpu.memory_space<vmem>>, %arg26: memref<8x32xbf16, #tpu.memory_space<vmem>>) attributes {dimension_semantics = [#tpu.dimension_semantics<parallel>, #tpu.dimension_semantics<arbitrary>], iteration_bounds = array<i64: 2, 1>, scalar_prefetch = 0 : i64, scratch_operands = 4 : i64, tpu.core_type = #tpu.core_type<tc>, window_params = [{transform_indices = @transform_0, window_bounds = array<i64: 1, 8, 32>}, {transform_indices = @transform_1, window_bounds = array<i64: 1, 8, 32>}, {transform_indices = @transform_2, window_bounds = array<i64: 1, 8, 32>}, {transform_indices = @transform_3, window_bounds = array<i64: 1, 8, 32>}, {pipeline_mode = #tpu.pipeline_mode<synchronous>, transform_indices = @transform_4, window_bounds = array<i64: 32, 32>}, {pipeline_mode = #tpu.pipeline_mode<synchronous>, transform_indices = @transform_5, window_bounds = array<i64: 1, 32>}, {pipeline_mode = #tpu.pipeline_mode<synchronous>, transform_indices = @transform_6, window_bounds = array<i64: 32, 32>}, {pipeline_mode = #tpu.pipeline_mode<synchronous>, transform_indices = @transform_7, window_bounds = array<i64: 1, 32>}, {pipeline_mode = #tpu.pipeline_mode<synchronous>, transform_indices = @transform_8, window_bounds = array<i64: 32, 32>}, {pipeline_mode = #tpu.pipeline_mode<synchronous>, transform_indices = @transform_9, window_bounds = array<i64: 1, 32>}, {pipeline_mode = #tpu.pipeline_mode<synchronous>, transform_indices = @transform_10, window_bounds = array<i64: 32, 32>}, {pipeline_mode = #tpu.pipeline_mode<synchronous>, transform_indices = @transform_11, window_bounds = array<i64: 1, 32>}, {pipeline_mode = #tpu.pipeline_mode<synchronous>, transform_indices = @transform_12, window_bounds = array<i64: 32, 64>}, {pipeline_mode = #tpu.pipeline_mode<synchronous>, transform_indices = @transform_13, window_bounds = array<i64: 1, 64>}, {pipeline_mode = #tpu.pipeline_mode<synchronous>, transform_indices = @transform_14, window_bounds = array<i64: 64, 32>}, {pipeline_mode = #tpu.pipeline_mode<synchronous>, transform_indices = @transform_15, window_bounds = array<i64: 1, 32>}, {pipeline_mode = #tpu.pipeline_mode<synchronous>, transform_indices = @transform_16, window_bounds = array<i64: 1, 32>}, {pipeline_mode = #tpu.pipeline_mode<synchronous>, transform_indices = @transform_17, window_bounds = array<i64: 1, 32>}, {pipeline_mode = #tpu.pipeline_mode<synchronous>, transform_indices = @transform_18, window_bounds = array<i64: 1, 32>}, {pipeline_mode = #tpu.pipeline_mode<synchronous>, transform_indices = @transform_19, window_bounds = array<i64: 1, 32>}, {transform_indices = @transform_20, window_bounds = array<i64: 1, 8, 32>}]} {
    %c0_i32 = arith.constant 0 : i32
    %0 = arith.cmpi eq, %arg1, %c0_i32 : i32
    %1 = arith.extui %0 : i1 to i32
    %c0_i32_0 = arith.constant 0 : i32
    %2 = arith.cmpi ne, %1, %c0_i32_0 : i32
    scf.if %2 {
      %c0_99 = arith.constant 0 : index
      %c0_100 = arith.constant 0 : index
      %c0_101 = arith.constant 0 : index
      %167 = vector.load %arg2[%c0_99, %c0_100, %c0_101] : memref<1x8x32xf32, #tpu.memory_space<vmem>>, vector<1x8x32xf32>
      %168 = vector.shape_cast %167 : vector<1x8x32xf32> to vector<8x32xf32>
      %c0_102 = arith.constant 0 : index
      %c0_103 = arith.constant 0 : index
      %c0_104 = arith.constant 0 : index
      %169 = vector.load %arg3[%c0_102, %c0_103, %c0_104] : memref<1x8x32xf32, #tpu.memory_space<vmem>>, vector<1x8x32xf32>
      %170 = vector.shape_cast %169 : vector<1x8x32xf32> to vector<8x32xf32>
      %171 = arith.addf %168, %170 : vector<8x32xf32>
      %172 = arith.truncf %171 : vector<8x32xf32> to vector<8x32xbf16>
      %c0_105 = arith.constant 0 : index
      %c0_106 = arith.constant 0 : index
      %173 = vector.load %arg8[%c0_105, %c0_106] : memref<32x32xbf16, #tpu.memory_space<vmem>>, vector<32x32xbf16>
      %cst_107 = arith.constant dense<0.000000e+00> : vector<8x32xf32>
      %174 = tpu.matmul %172, %173, %cst_107 {dimension_numbers = #tpu.dot_dimension_numbers<[1], [0], [0], [1], [0, 0, 1, 1], [], []>} : vector<8x32xbf16>, vector<32x32xbf16>, vector<8x32xf32> -> vector<8x32xf32>
      %c0_108 = arith.constant 0 : index
      %c0_109 = arith.constant 0 : index
      %175 = vector.load %arg9[%c0_108, %c0_109] : memref<1x32xf32, #tpu.memory_space<vmem>>, vector<1x32xf32>
      %176 = vector.broadcast %175 : vector<1x32xf32> to vector<8x32xf32>
      %177 = arith.addf %174, %176 : vector<8x32xf32>
      %178 = arith.truncf %168 : vector<8x32xf32> to vector<8x32xbf16>
      %c0_110 = arith.constant 0 : index
      %c0_111 = arith.constant 0 : index
      %179 = vector.load %arg10[%c0_110, %c0_111] : memref<32x32xbf16, #tpu.memory_space<vmem>>, vector<32x32xbf16>
      %cst_112 = arith.constant dense<0.000000e+00> : vector<8x32xf32>
      %180 = tpu.matmul %178, %179, %cst_112 {dimension_numbers = #tpu.dot_dimension_numbers<[1], [0], [0], [1], [0, 0, 1, 1], [], []>} : vector<8x32xbf16>, vector<32x32xbf16>, vector<8x32xf32> -> vector<8x32xf32>
      %c0_113 = arith.constant 0 : index
      %c0_114 = arith.constant 0 : index
      %181 = vector.load %arg11[%c0_113, %c0_114] : memref<1x32xf32, #tpu.memory_space<vmem>>, vector<1x32xf32>
      %182 = vector.broadcast %181 : vector<1x32xf32> to vector<8x32xf32>
      %183 = arith.addf %180, %182 : vector<8x32xf32>
      %184 = arith.truncf %177 : vector<8x32xf32> to vector<8x32xbf16>
      %c0_115 = arith.constant 0 : index
      %c0_116 = arith.constant 0 : index
      %185 = vector.load %arg23[%c0_115, %c0_116] : memref<8x32xbf16, #tpu.memory_space<vmem>>, vector<8x32xbf16>
      tpu.vector_store %arg23[%c0_115, %c0_116], %184 {strides = array<i32>} : memref<8x32xbf16, #tpu.memory_space<vmem>>, vector<8x32xbf16>,
      %186 = arith.truncf %183 : vector<8x32xf32> to vector<8x32xbf16>
      %c0_117 = arith.constant 0 : index
      %c0_118 = arith.constant 0 : index
      %187 = vector.load %arg24[%c0_117, %c0_118] : memref<8x32xbf16, #tpu.memory_space<vmem>>, vector<8x32xbf16>
      tpu.vector_store %arg24[%c0_117, %c0_118], %186 {strides = array<i32>} : memref<8x32xbf16, #tpu.memory_space<vmem>>, vector<8x32xbf16>,
    } else {
    }
    %c0 = arith.constant 0 : index
    %c0_1 = arith.constant 0 : index
    %c0_2 = arith.constant 0 : index
    %3 = vector.load %arg4[%c0, %c0_1, %c0_2] : memref<1x8x32xf32, #tpu.memory_space<vmem>>, vector<1x8x32xf32>
    %4 = vector.shape_cast %3 : vector<1x8x32xf32> to vector<8x32xf32>
    %c0_3 = arith.constant 0 : index
    %c0_4 = arith.constant 0 : index
    %c0_5 = arith.constant 0 : index
    %5 = vector.load %arg5[%c0_3, %c0_4, %c0_5] : memref<1x8x32xf32, #tpu.memory_space<vmem>>, vector<1x8x32xf32>
    %6 = vector.shape_cast %5 : vector<1x8x32xf32> to vector<8x32xf32>
    %7 = arith.addf %4, %6 : vector<8x32xf32>
    %8 = arith.truncf %7 : vector<8x32xf32> to vector<8x32xbf16>
    %c0_6 = arith.constant 0 : index
    %c0_7 = arith.constant 0 : index
    %9 = vector.load %arg6[%c0_6, %c0_7] : memref<32x32xbf16, #tpu.memory_space<vmem>>, vector<32x32xbf16>
    %cst = arith.constant dense<0.000000e+00> : vector<8x32xf32>
    %10 = tpu.matmul %8, %9, %cst {dimension_numbers = #tpu.dot_dimension_numbers<[1], [0], [0], [1], [0, 0, 1, 1], [], []>} : vector<8x32xbf16>, vector<32x32xbf16>, vector<8x32xf32> -> vector<8x32xf32>
    %c0_8 = arith.constant 0 : index
    %c0_9 = arith.constant 0 : index
    %11 = vector.load %arg7[%c0_8, %c0_9] : memref<1x32xf32, #tpu.memory_space<vmem>>, vector<1x32xf32>
    %12 = vector.broadcast %11 : vector<1x32xf32> to vector<8x32xf32>
    %13 = arith.addf %10, %12 : vector<8x32xf32>
    %14 = arith.truncf %13 : vector<8x32xf32> to vector<8x32xbf16>
    %c0_10 = arith.constant 0 : index
    %c0_11 = arith.constant 0 : index
    %15 = vector.load %arg25[%c0_10, %c0_11] : memref<8x32xbf16, #tpu.memory_space<vmem>>, vector<8x32xbf16>
    tpu.vector_store %arg25[%c0_10, %c0_11], %14 {strides = array<i32>} : memref<8x32xbf16, #tpu.memory_space<vmem>>, vector<8x32xbf16>,
    %c0_12 = arith.constant 0 : index
    %c0_13 = arith.constant 0 : index
    %16 = vector.load %arg25[%c0_12, %c0_13] : memref<8x32xbf16, #tpu.memory_space<vmem>>, vector<8x8xbf16>
    %c0_14 = arith.constant 0 : index
    %c0_15 = arith.constant 0 : index
    %17 = vector.load %arg23[%c0_14, %c0_15] : memref<8x32xbf16, #tpu.memory_space<vmem>>, vector<8x8xbf16>
    %cst_16 = arith.constant dense<0.000000e+00> : vector<8x8xf32>
    %18 = tpu.matmul %16, %17, %cst_16 {dimension_numbers = #tpu.dot_dimension_numbers<[1], [1], [0], [0], [0, 0, 1, 0], [], []>} : vector<8x8xbf16>, vector<8x8xbf16>, vector<8x8xf32> -> vector<8x8xf32>
    %cst_17 = arith.constant dense<0xFF800000> : vector<8xf32>
    %19 = vector.multi_reduction <maximumf>, %18, %cst_17 [1] : vector<8x8xf32> to vector<8xf32>
    %20 = vector.shape_cast %19 : vector<8xf32> to vector<8x1xf32>
    %21 = vector.broadcast %20 : vector<8x1xf32> to vector<8x8xf32>
    %22 = arith.subf %18, %21 : vector<8x8xf32>
    %23 = math.exp %22 : vector<8x8xf32>
    %cst_18 = arith.constant dense<0.000000e+00> : vector<8xf32>
    %24 = vector.multi_reduction <add>, %23, %cst_18 [1] : vector<8x8xf32> to vector<8xf32>
    %25 = vector.shape_cast %24 : vector<8xf32> to vector<8x1xf32>
    %26 = tpu.reciprocal %25 {approx = true} : vector<8x1xf32> -> vector<8x1xf32>
    %27 = vector.broadcast %26 : vector<8x1xf32> to vector<8x8xf32>
    %28 = arith.mulf %23, %27 : vector<8x8xf32>
    %29 = arith.truncf %28 : vector<8x8xf32> to vector<8x8xbf16>
    %c0_19 = arith.constant 0 : index
    %c0_20 = arith.constant 0 : index
    %30 = vector.load %arg24[%c0_19, %c0_20] : memref<8x32xbf16, #tpu.memory_space<vmem>>, vector<8x8xbf16>
    %cst_21 = arith.constant dense<0.000000e+00> : vector<8x8xf32>
    %31 = tpu.matmul %29, %30, %cst_21 {dimension_numbers = #tpu.dot_dimension_numbers<[1], [0], [0], [1], [0, 0, 1, 1], [], []>} : vector<8x8xbf16>, vector<8x8xbf16>, vector<8x8xf32> -> vector<8x8xf32>
    %32 = arith.truncf %31 : vector<8x8xf32> to vector<8x8xbf16>
    %c0_22 = arith.constant 0 : index
    %c0_23 = arith.constant 0 : index
    %33 = vector.load %arg26[%c0_22, %c0_23] : memref<8x32xbf16, #tpu.memory_space<vmem>>, vector<8x8xbf16>
    tpu.vector_store %arg26[%c0_22, %c0_23], %32 {strides = array<i32>} : memref<8x32xbf16, #tpu.memory_space<vmem>>, vector<8x8xbf16>,
    %c0_24 = arith.constant 0 : index
    %c8 = arith.constant 8 : index
    %34 = vector.load %arg25[%c0_24, %c8] : memref<8x32xbf16, #tpu.memory_space<vmem>>, vector<8x8xbf16>
    %c0_25 = arith.constant 0 : index
    %c8_26 = arith.constant 8 : index
    %35 = vector.load %arg23[%c0_25, %c8_26] : memref<8x32xbf16, #tpu.memory_space<vmem>>, vector<8x8xbf16>
    %cst_27 = arith.constant dense<0.000000e+00> : vector<8x8xf32>
    %36 = tpu.matmul %34, %35, %cst_27 {dimension_numbers = #tpu.dot_dimension_numbers<[1], [1], [0], [0], [0, 0, 1, 0], [], []>} : vector<8x8xbf16>, vector<8x8xbf16>, vector<8x8xf32> -> vector<8x8xf32>
    %cst_28 = arith.constant dense<0xFF800000> : vector<8xf32>
    %37 = vector.multi_reduction <maximumf>, %36, %cst_28 [1] : vector<8x8xf32> to vector<8xf32>
    %38 = vector.shape_cast %37 : vector<8xf32> to vector<8x1xf32>
    %39 = vector.broadcast %38 : vector<8x1xf32> to vector<8x8xf32>
    %40 = arith.subf %36, %39 : vector<8x8xf32>
    %41 = math.exp %40 : vector<8x8xf32>
    %cst_29 = arith.constant dense<0.000000e+00> : vector<8xf32>
    %42 = vector.multi_reduction <add>, %41, %cst_29 [1] : vector<8x8xf32> to vector<8xf32>
    %43 = vector.shape_cast %42 : vector<8xf32> to vector<8x1xf32>
    %44 = tpu.reciprocal %43 {approx = true} : vector<8x1xf32> -> vector<8x1xf32>
    %45 = vector.broadcast %44 : vector<8x1xf32> to vector<8x8xf32>
    %46 = arith.mulf %41, %45 : vector<8x8xf32>
    %47 = arith.truncf %46 : vector<8x8xf32> to vector<8x8xbf16>
    %c0_30 = arith.constant 0 : index
    %c8_31 = arith.constant 8 : index
    %48 = vector.load %arg24[%c0_30, %c8_31] : memref<8x32xbf16, #tpu.memory_space<vmem>>, vector<8x8xbf16>
    %cst_32 = arith.constant dense<0.000000e+00> : vector<8x8xf32>
    %49 = tpu.matmul %47, %48, %cst_32 {dimension_numbers = #tpu.dot_dimension_numbers<[1], [0], [0], [1], [0, 0, 1, 1], [], []>} : vector<8x8xbf16>, vector<8x8xbf16>, vector<8x8xf32> -> vector<8x8xf32>
    %50 = arith.truncf %49 : vector<8x8xf32> to vector<8x8xbf16>
    %c0_33 = arith.constant 0 : index
    %c8_34 = arith.constant 8 : index
    %51 = vector.load %arg26[%c0_33, %c8_34] : memref<8x32xbf16, #tpu.memory_space<vmem>>, vector<8x8xbf16>
    tpu.vector_store %arg26[%c0_33, %c8_34], %50 {strides = array<i32>} : memref<8x32xbf16, #tpu.memory_space<vmem>>, vector<8x8xbf16>,
    %c0_35 = arith.constant 0 : index
    %c16 = arith.constant 16 : index
    %52 = vector.load %arg25[%c0_35, %c16] : memref<8x32xbf16, #tpu.memory_space<vmem>>, vector<8x8xbf16>
    %c0_36 = arith.constant 0 : index
    %c16_37 = arith.constant 16 : index
    %53 = vector.load %arg23[%c0_36, %c16_37] : memref<8x32xbf16, #tpu.memory_space<vmem>>, vector<8x8xbf16>
    %cst_38 = arith.constant dense<0.000000e+00> : vector<8x8xf32>
    %54 = tpu.matmul %52, %53, %cst_38 {dimension_numbers = #tpu.dot_dimension_numbers<[1], [1], [0], [0], [0, 0, 1, 0], [], []>} : vector<8x8xbf16>, vector<8x8xbf16>, vector<8x8xf32> -> vector<8x8xf32>
    %cst_39 = arith.constant dense<0xFF800000> : vector<8xf32>
    %55 = vector.multi_reduction <maximumf>, %54, %cst_39 [1] : vector<8x8xf32> to vector<8xf32>
    %56 = vector.shape_cast %55 : vector<8xf32> to vector<8x1xf32>
    %57 = vector.broadcast %56 : vector<8x1xf32> to vector<8x8xf32>
    %58 = arith.subf %54, %57 : vector<8x8xf32>
    %59 = math.exp %58 : vector<8x8xf32>
    %cst_40 = arith.constant dense<0.000000e+00> : vector<8xf32>
    %60 = vector.multi_reduction <add>, %59, %cst_40 [1] : vector<8x8xf32> to vector<8xf32>
    %61 = vector.shape_cast %60 : vector<8xf32> to vector<8x1xf32>
    %62 = tpu.reciprocal %61 {approx = true} : vector<8x1xf32> -> vector<8x1xf32>
    %63 = vector.broadcast %62 : vector<8x1xf32> to vector<8x8xf32>
    %64 = arith.mulf %59, %63 : vector<8x8xf32>
    %65 = arith.truncf %64 : vector<8x8xf32> to vector<8x8xbf16>
    %c0_41 = arith.constant 0 : index
    %c16_42 = arith.constant 16 : index
    %66 = vector.load %arg24[%c0_41, %c16_42] : memref<8x32xbf16, #tpu.memory_space<vmem>>, vector<8x8xbf16>
    %cst_43 = arith.constant dense<0.000000e+00> : vector<8x8xf32>
    %67 = tpu.matmul %65, %66, %cst_43 {dimension_numbers = #tpu.dot_dimension_numbers<[1], [0], [0], [1], [0, 0, 1, 1], [], []>} : vector<8x8xbf16>, vector<8x8xbf16>, vector<8x8xf32> -> vector<8x8xf32>
    %68 = arith.truncf %67 : vector<8x8xf32> to vector<8x8xbf16>
    %c0_44 = arith.constant 0 : index
    %c16_45 = arith.constant 16 : index
    %69 = vector.load %arg26[%c0_44, %c16_45] : memref<8x32xbf16, #tpu.memory_space<vmem>>, vector<8x8xbf16>
    tpu.vector_store %arg26[%c0_44, %c16_45], %68 {strides = array<i32>} : memref<8x32xbf16, #tpu.memory_space<vmem>>, vector<8x8xbf16>,
    %c0_46 = arith.constant 0 : index
    %c24 = arith.constant 24 : index
    %70 = vector.load %arg25[%c0_46, %c24] : memref<8x32xbf16, #tpu.memory_space<vmem>>, vector<8x8xbf16>
    %c0_47 = arith.constant 0 : index
    %c24_48 = arith.constant 24 : index
    %71 = vector.load %arg23[%c0_47, %c24_48] : memref<8x32xbf16, #tpu.memory_space<vmem>>, vector<8x8xbf16>
    %cst_49 = arith.constant dense<0.000000e+00> : vector<8x8xf32>
    %72 = tpu.matmul %70, %71, %cst_49 {dimension_numbers = #tpu.dot_dimension_numbers<[1], [1], [0], [0], [0, 0, 1, 0], [], []>} : vector<8x8xbf16>, vector<8x8xbf16>, vector<8x8xf32> -> vector<8x8xf32>
    %cst_50 = arith.constant dense<0xFF800000> : vector<8xf32>
    %73 = vector.multi_reduction <maximumf>, %72, %cst_50 [1] : vector<8x8xf32> to vector<8xf32>
    %74 = vector.shape_cast %73 : vector<8xf32> to vector<8x1xf32>
    %75 = vector.broadcast %74 : vector<8x1xf32> to vector<8x8xf32>
    %76 = arith.subf %72, %75 : vector<8x8xf32>
    %77 = math.exp %76 : vector<8x8xf32>
    %cst_51 = arith.constant dense<0.000000e+00> : vector<8xf32>
    %78 = vector.multi_reduction <add>, %77, %cst_51 [1] : vector<8x8xf32> to vector<8xf32>
    %79 = vector.shape_cast %78 : vector<8xf32> to vector<8x1xf32>
    %80 = tpu.reciprocal %79 {approx = true} : vector<8x1xf32> -> vector<8x1xf32>
    %81 = vector.broadcast %80 : vector<8x1xf32> to vector<8x8xf32>
    %82 = arith.mulf %77, %81 : vector<8x8xf32>
    %83 = arith.truncf %82 : vector<8x8xf32> to vector<8x8xbf16>
    %c0_52 = arith.constant 0 : index
    %c24_53 = arith.constant 24 : index
    %84 = vector.load %arg24[%c0_52, %c24_53] : memref<8x32xbf16, #tpu.memory_space<vmem>>, vector<8x8xbf16>
    %cst_54 = arith.constant dense<0.000000e+00> : vector<8x8xf32>
    %85 = tpu.matmul %83, %84, %cst_54 {dimension_numbers = #tpu.dot_dimension_numbers<[1], [0], [0], [1], [0, 0, 1, 1], [], []>} : vector<8x8xbf16>, vector<8x8xbf16>, vector<8x8xf32> -> vector<8x8xf32>
    %86 = arith.truncf %85 : vector<8x8xf32> to vector<8x8xbf16>
    %c0_55 = arith.constant 0 : index
    %c24_56 = arith.constant 24 : index
    %87 = vector.load %arg26[%c0_55, %c24_56] : memref<8x32xbf16, #tpu.memory_space<vmem>>, vector<8x8xbf16>
    tpu.vector_store %arg26[%c0_55, %c24_56], %86 {strides = array<i32>} : memref<8x32xbf16, #tpu.memory_space<vmem>>, vector<8x8xbf16>,
    %c0_57 = arith.constant 0 : index
    %c0_58 = arith.constant 0 : index
    %88 = vector.load %arg26[%c0_57, %c0_58] : memref<8x32xbf16, #tpu.memory_space<vmem>>, vector<8x32xbf16>
    %c0_59 = arith.constant 0 : index
    %c0_60 = arith.constant 0 : index
    %89 = vector.load %arg12[%c0_59, %c0_60] : memref<32x32xbf16, #tpu.memory_space<vmem>>, vector<32x32xbf16>
    %cst_61 = arith.constant dense<0.000000e+00> : vector<8x32xf32>
    %90 = tpu.matmul %88, %89, %cst_61 {dimension_numbers = #tpu.dot_dimension_numbers<[1], [0], [0], [1], [0, 0, 1, 1], [], []>} : vector<8x32xbf16>, vector<32x32xbf16>, vector<8x32xf32> -> vector<8x32xf32>
    %c0_62 = arith.constant 0 : index
    %c0_63 = arith.constant 0 : index
    %91 = vector.load %arg13[%c0_62, %c0_63] : memref<1x32xf32, #tpu.memory_space<vmem>>, vector<1x32xf32>
    %92 = vector.broadcast %91 : vector<1x32xf32> to vector<8x32xf32>
    %93 = arith.addf %90, %92 : vector<8x32xf32>
    %94 = arith.addf %4, %93 : vector<8x32xf32>
    %c0_64 = arith.constant 0 : index
    %c0_65 = arith.constant 0 : index
    %95 = vector.load %arg18[%c0_64, %c0_65] : memref<1x32xf32, #tpu.memory_space<vmem>>, vector<1x32xf32>
    %c0_66 = arith.constant 0 : index
    %c0_67 = arith.constant 0 : index
    %96 = vector.load %arg19[%c0_66, %c0_67] : memref<1x32xf32, #tpu.memory_space<vmem>>, vector<1x32xf32>
    %cst_68 = arith.constant dense<0.000000e+00> : vector<8xf32>
    %97 = vector.multi_reduction <add>, %94, %cst_68 [1] : vector<8x32xf32> to vector<8xf32>
    %98 = vector.shape_cast %97 : vector<8xf32> to vector<8x1xf32>
    %99 = arith.mulf %94, %94 : vector<8x32xf32>
    %cst_69 = arith.constant dense<0.000000e+00> : vector<8xf32>
    %100 = vector.multi_reduction <add>, %99, %cst_69 [1] : vector<8x32xf32> to vector<8xf32>
    %101 = vector.shape_cast %100 : vector<8xf32> to vector<8x1xf32>
    %cst_70 = arith.constant 3.125000e-02 : f32
    %102 = vector.broadcast %cst_70 : f32 to vector<8x1xf32>
    %103 = arith.mulf %98, %102 : vector<8x1xf32>
    %cst_71 = arith.constant 3.125000e-02 : f32
    %104 = vector.broadcast %cst_71 : f32 to vector<8x1xf32>
    %105 = arith.mulf %101, %104 : vector<8x1xf32>
    %106 = arith.mulf %103, %103 : vector<8x1xf32>
    %107 = arith.subf %105, %106 : vector<8x1xf32>
    %cst_72 = arith.constant 0.000000e+00 : f32
    %108 = vector.broadcast %cst_72 : f32 to vector<8x1xf32>
    %109 = arith.maximumf %107, %108 : vector<8x1xf32>
    %110 = vector.broadcast %103 : vector<8x1xf32> to vector<8x32xf32>
    %111 = arith.subf %94, %110 : vector<8x32xf32>
    %cst_73 = arith.constant 9.99999974E-6 : f32
    %112 = vector.broadcast %cst_73 : f32 to vector<8x1xf32>
    %113 = arith.addf %109, %112 : vector<8x1xf32>
    %114 = math.rsqrt %113 : vector<8x1xf32>
    %115 = vector.broadcast %114 : vector<8x1xf32> to vector<8x32xf32>
    %116 = arith.mulf %111, %115 : vector<8x32xf32>
    %117 = vector.broadcast %95 : vector<1x32xf32> to vector<8x32xf32>
    %118 = arith.mulf %116, %117 : vector<8x32xf32>
    %119 = vector.broadcast %96 : vector<1x32xf32> to vector<8x32xf32>
    %120 = arith.addf %118, %119 : vector<8x32xf32>
    %121 = arith.truncf %120 : vector<8x32xf32> to vector<8x32xbf16>
    %cst_74 = arith.constant 0.000000e+00 : f32
    %122 = vector.broadcast %cst_74 : f32 to vector<8x32xf32>
    %c0_75 = arith.constant 0 : index
    %c0_76 = arith.constant 0 : index
    %123 = vector.load %arg14[%c0_75, %c0_76] : memref<32x64xbf16, #tpu.memory_space<vmem>>, vector<32x64xbf16>
    %cst_77 = arith.constant dense<0.000000e+00> : vector<8x64xf32>
    %124 = tpu.matmul %121, %123, %cst_77 {dimension_numbers = #tpu.dot_dimension_numbers<[1], [0], [0], [1], [0, 0, 1, 1], [], []>} : vector<8x32xbf16>, vector<32x64xbf16>, vector<8x64xf32> -> vector<8x64xf32>
    %c0_78 = arith.constant 0 : index
    %c0_79 = arith.constant 0 : index
    %125 = vector.load %arg15[%c0_78, %c0_79] : memref<1x64xf32, #tpu.memory_space<vmem>>, vector<1x64xf32>
    %126 = vector.broadcast %125 : vector<1x64xf32> to vector<8x64xf32>
    %127 = arith.addf %124, %126 : vector<8x64xf32>
    %cst_80 = arith.constant 0.000000e+00 : f32
    %128 = vector.broadcast %cst_80 : f32 to vector<8x64xf32>
    %129 = arith.maximumf %127, %128 : vector<8x64xf32>
    %130 = arith.truncf %129 : vector<8x64xf32> to vector<8x64xbf16>
    %c0_81 = arith.constant 0 : index
    %c0_82 = arith.constant 0 : index
    %131 = vector.load %arg16[%c0_81, %c0_82] : memref<64x32xbf16, #tpu.memory_space<vmem>>, vector<64x32xbf16>
    %cst_83 = arith.constant dense<0.000000e+00> : vector<8x32xf32>
    %132 = tpu.matmul %130, %131, %cst_83 {dimension_numbers = #tpu.dot_dimension_numbers<[1], [0], [0], [1], [0, 0, 1, 1], [], []>} : vector<8x64xbf16>, vector<64x32xbf16>, vector<8x32xf32> -> vector<8x32xf32>
    %133 = arith.addf %122, %132 : vector<8x32xf32>
    %134 = arith.addf %120, %133 : vector<8x32xf32>
    %c0_84 = arith.constant 0 : index
    %c0_85 = arith.constant 0 : index
    %135 = vector.load %arg17[%c0_84, %c0_85] : memref<1x32xf32, #tpu.memory_space<vmem>>, vector<1x32xf32>
    %136 = vector.broadcast %135 : vector<1x32xf32> to vector<8x32xf32>
    %137 = arith.addf %134, %136 : vector<8x32xf32>
    %c0_86 = arith.constant 0 : index
    %c0_87 = arith.constant 0 : index
    %138 = vector.load %arg20[%c0_86, %c0_87] : memref<1x32xf32, #tpu.memory_space<vmem>>, vector<1x32xf32>
    %c0_88 = arith.constant 0 : index
    %c0_89 = arith.constant 0 : index
    %139 = vector.load %arg21[%c0_88, %c0_89] : memref<1x32xf32, #tpu.memory_space<vmem>>, vector<1x32xf32>
    %cst_90 = arith.constant dense<0.000000e+00> : vector<8xf32>
    %140 = vector.multi_reduction <add>, %137, %cst_90 [1] : vector<8x32xf32> to vector<8xf32>
    %141 = vector.shape_cast %140 : vector<8xf32> to vector<8x1xf32>
    %142 = arith.mulf %137, %137 : vector<8x32xf32>
    %cst_91 = arith.constant dense<0.000000e+00> : vector<8xf32>
    %143 = vector.multi_reduction <add>, %142, %cst_91 [1] : vector<8x32xf32> to vector<8xf32>
    %144 = vector.shape_cast %143 : vector<8xf32> to vector<8x1xf32>
    %cst_92 = arith.constant 3.125000e-02 : f32
    %145 = vector.broadcast %cst_92 : f32 to vector<8x1xf32>
    %146 = arith.mulf %141, %145 : vector<8x1xf32>
    %cst_93 = arith.constant 3.125000e-02 : f32
    %147 = vector.broadcast %cst_93 : f32 to vector<8x1xf32>
    %148 = arith.mulf %144, %147 : vector<8x1xf32>
    %149 = arith.mulf %146, %146 : vector<8x1xf32>
    %150 = arith.subf %148, %149 : vector<8x1xf32>
    %cst_94 = arith.constant 0.000000e+00 : f32
    %151 = vector.broadcast %cst_94 : f32 to vector<8x1xf32>
    %152 = arith.maximumf %150, %151 : vector<8x1xf32>
    %153 = vector.broadcast %146 : vector<8x1xf32> to vector<8x32xf32>
    %154 = arith.subf %137, %153 : vector<8x32xf32>
    %cst_95 = arith.constant 9.99999974E-6 : f32
    %155 = vector.broadcast %cst_95 : f32 to vector<8x1xf32>
    %156 = arith.addf %152, %155 : vector<8x1xf32>
    %157 = math.rsqrt %156 : vector<8x1xf32>
    %158 = vector.broadcast %157 : vector<8x1xf32> to vector<8x32xf32>
    %159 = arith.mulf %154, %158 : vector<8x32xf32>
    %160 = vector.broadcast %138 : vector<1x32xf32> to vector<8x32xf32>
    %161 = arith.mulf %159, %160 : vector<8x32xf32>
    %162 = vector.broadcast %139 : vector<1x32xf32> to vector<8x32xf32>
    %163 = arith.addf %161, %162 : vector<8x32xf32>
    %c0_96 = arith.constant 0 : index
    %c0_97 = arith.constant 0 : index
    %c0_98 = arith.constant 0 : index
    %164 = vector.load %arg22[%c0_96, %c0_97, %c0_98] : memref<1x8x32xf32, #tpu.memory_space<vmem>>, vector<1x8x32xf32>
    %165 = vector.shape_cast %164 : vector<1x8x32xf32> to vector<8x32xf32>
    %166 = vector.shape_cast %163 : vector<8x32xf32> to vector<1x8x32xf32>
    tpu.vector_store %arg22[%c0_96, %c0_97, %c0_98], %166 {strides = array<i32>} : memref<1x8x32xf32, #tpu.memory_space<vmem>>, vector<1x8x32xf32>,
    return
  }
  func.func @transform_0(%arg0: i32, %arg1: i32) -> (i32, i32, i32) {
    %c0_i32 = arith.constant 0 : i32
    %c0_i32_0 = arith.constant 0 : i32
    %c0_i32_1 = arith.constant 0 : i32
    return %arg0, %c0_i32, %c0_i32_0 : i32, i32, i32
  }
  func.func @transform_1(%arg0: i32, %arg1: i32) -> (i32, i32, i32) {
    %c0_i32 = arith.constant 0 : i32
    %c0_i32_0 = arith.constant 0 : i32
    %c0_i32_1 = arith.constant 0 : i32
    return %arg0, %c0_i32, %c0_i32_0 : i32, i32, i32
  }
  func.func @transform_2(%arg0: i32, %arg1: i32) -> (i32, i32, i32) {
    %c0_i32 = arith.constant 0 : i32
    %c0_i32_0 = arith.constant 0 : i32
    return %arg0, %arg1, %c0_i32 : i32, i32, i32
  }
  func.func @transform_3(%arg0: i32, %arg1: i32) -> (i32, i32, i32) {
    %c0_i32 = arith.constant 0 : i32
    %c0_i32_0 = arith.constant 0 : i32
    return %arg0, %arg1, %c0_i32 : i32, i32, i32
  }
  func.func @transform_4(%arg0: i32, %arg1: i32) -> (i32, i32) {
    %c0_i32 = arith.constant 0 : i32
    %c0_i32_0 = arith.constant 0 : i32
    %c0_i32_1 = arith.constant 0 : i32
    return %c0_i32, %c0_i32_0 : i32, i32
  }
  func.func @transform_5(%arg0: i32, %arg1: i32) -> (i32, i32) {
    %c0_i32 = arith.constant 0 : i32
    %c0_i32_0 = arith.constant 0 : i32
    %c0_i32_1 = arith.constant 0 : i32
    return %c0_i32, %c0_i32_0 : i32, i32
  }
  func.func @transform_6(%arg0: i32, %arg1: i32) -> (i32, i32) {
    %c0_i32 = arith.constant 0 : i32
    %c0_i32_0 = arith.constant 0 : i32
    %c0_i32_1 = arith.constant 0 : i32
    return %c0_i32, %c0_i32_0 : i32, i32
  }
  func.func @transform_7(%arg0: i32, %arg1: i32) -> (i32, i32) {
    %c0_i32 = arith.constant 0 : i32
    %c0_i32_0 = arith.constant 0 : i32
    %c0_i32_1 = arith.constant 0 : i32
    return %c0_i32, %c0_i32_0 : i32, i32
  }
  func.func @transform_8(%arg0: i32, %arg1: i32) -> (i32, i32) {
    %c0_i32 = arith.constant 0 : i32
    %c0_i32_0 = arith.constant 0 : i32
    %c0_i32_1 = arith.constant 0 : i32
    return %c0_i32, %c0_i32_0 : i32, i32
  }
  func.func @transform_9(%arg0: i32, %arg1: i32) -> (i32, i32) {
    %c0_i32 = arith.constant 0 : i32
    %c0_i32_0 = arith.constant 0 : i32
    %c0_i32_1 = arith.constant 0 : i32
    return %c0_i32, %c0_i32_0 : i32, i32
  }
  func.func @transform_10(%arg0: i32, %arg1: i32) -> (i32, i32) {
    %c0_i32 = arith.constant 0 : i32
    %c0_i32_0 = arith.constant 0 : i32
    %c0_i32_1 = arith.constant 0 : i32
    return %c0_i32, %c0_i32_0 : i32, i32
  }
  func.func @transform_11(%arg0: i32, %arg1: i32) -> (i32, i32) {
    %c0_i32 = arith.constant 0 : i32
    %c0_i32_0 = arith.constant 0 : i32
    %c0_i32_1 = arith.constant 0 : i32
    return %c0_i32, %c0_i32_0 : i32, i32
  }
  func.func @transform_12(%arg0: i32, %arg1: i32) -> (i32, i32) {
    %c0_i32 = arith.constant 0 : i32
    %c0_i32_0 = arith.constant 0 : i32
    %c0_i32_1 = arith.constant 0 : i32
    return %c0_i32, %c0_i32_0 : i32, i32
  }
  func.func @transform_13(%arg0: i32, %arg1: i32) -> (i32, i32) {
    %c0_i32 = arith.constant 0 : i32
    %c0_i32_0 = arith.constant 0 : i32
    %c0_i32_1 = arith.constant 0 : i32
    return %c0_i32, %c0_i32_0 : i32, i32
  }
  func.func @transform_14(%arg0: i32, %arg1: i32) -> (i32, i32) {
    %c0_i32 = arith.constant 0 : i32
    %c0_i32_0 = arith.constant 0 : i32
    %c0_i32_1 = arith.constant 0 : i32
    return %c0_i32, %c0_i32_0 : i32, i32
  }
  func.func @transform_15(%arg0: i32, %arg1: i32) -> (i32, i32) {
    %c0_i32 = arith.constant 0 : i32
    %c0_i32_0 = arith.constant 0 : i32
    %c0_i32_1 = arith.constant 0 : i32
    return %c0_i32, %c0_i32_0 : i32, i32
  }
  func.func @transform_16(%arg0: i32, %arg1: i32) -> (i32, i32) {
    %c0_i32 = arith.constant 0 : i32
    %c0_i32_0 = arith.constant 0 : i32
    %c0_i32_1 = arith.constant 0 : i32
    return %c0_i32, %c0_i32_0 : i32, i32
  }
  func.func @transform_17(%arg0: i32, %arg1: i32) -> (i32, i32) {
    %c0_i32 = arith.constant 0 : i32
    %c0_i32_0 = arith.constant 0 : i32
    %c0_i32_1 = arith.constant 0 : i32
    return %c0_i32, %c0_i32_0 : i32, i32
  }
  func.func @transform_18(%arg0: i32, %arg1: i32) -> (i32, i32) {
    %c0_i32 = arith.constant 0 : i32
    %c0_i32_0 = arith.constant 0 : i32
    %c0_i32_1 = arith.constant 0 : i32
    return %c0_i32, %c0_i32_0 : i32, i32
  }
  func.func @transform_19(%arg0: i32, %arg1: i32) -> (i32, i32) {
    %c0_i32 = arith.constant 0 : i32
    %c0_i32_0 = arith.constant 0 : i32
    %c0_i32_1 = arith.constant 0 : i32
    return %c0_i32, %c0_i32_0 : i32, i32
  }
  func.func @transform_20(%arg0: i32, %arg1: i32) -> (i32, i32, i32) {
    %c0_i32 = arith.constant 0 : i32
    %c0_i32_0 = arith.constant 0 : i32
    return %arg0, %arg1, %c0_i32 : i32, i32, i32
  }
}

</mosaic_0001>

<llo_original>
// kernel: tpu_custom_call.1
$region0: #{tpu_custom_call.1}
  #allocation0 [shape = 'u32[]', space=smem, size = 0x4, offset = 0x4, fixed_abs, tag = 'smem constant byte address 0x4 - core index']
  #allocation1 [shape = 'u32[144,128]{1,0:T(1,128)}', space=vmem, size = 0x12000, scoped, tag = 'internal scratch']
  #allocation2 [shape = 'bf16[8,32]{1,0:T(8,128)(2,1)}', space=vmem, size = 0x800, scoped, tag = 'scratch operand']
  #allocation3 [shape = 'bf16[8,32]{1,0:T(8,128)(2,1)}', space=vmem, size = 0x800, scoped, tag = 'scratch operand']
  #allocation4 [shape = 'bf16[8,32]{1,0:T(8,128)(2,1)}', space=vmem, size = 0x800, scoped, tag = 'scratch operand']
  #allocation5 [shape = 'bf16[8,32]{1,0:T(8,128)(2,1)}', space=vmem, size = 0x800, scoped, tag = 'scratch operand']
  %s0 = inlined_call_operand.vmem [shape: f32[2,8,32], index: 0, kind: input, shape index: {}]
  %s1 = inlined_call_operand.vmem [shape: f32[2,8,32], index: 1, kind: input, shape index: {}]
  %s2 = inlined_call_operand.vmem [shape: f32[2,8,32], index: 2, kind: input, shape index: {}]
  %s3 = inlined_call_operand.hbm [shape: f32[2,8,32], index: 3, kind: input, shape index: {}]
  %s4 = inlined_call_operand.hbm [shape: bf16[32,32], index: 4, kind: input, shape index: {}]
  %s5 = inlined_call_operand.vmem [shape: f32[1,32], index: 5, kind: input, shape index: {}]
  %s6 = inlined_call_operand.hbm [shape: bf16[32,32], index: 6, kind: input, shape index: {}]
  %s7 = inlined_call_operand.vmem [shape: f32[1,32], index: 7, kind: input, shape index: {}]
  %s8 = inlined_call_operand.hbm [shape: bf16[32,32], index: 8, kind: input, shape index: {}]
  %s9 = inlined_call_operand.hbm [shape: f32[1,32], index: 9, kind: input, shape index: {}]
  %s10 = inlined_call_operand.vmem [shape: bf16[32,32], index: 10, kind: input, shape index: {}]
  %s11 = inlined_call_operand.vmem [shape: f32[1,32], index: 11, kind: input, shape index: {}]
  %s12 = inlined_call_operand.hbm [shape: bf16[32,64], index: 12, kind: input, shape index: {}]
  %s13 = inlined_call_operand.vmem [shape: f32[1,64], index: 13, kind: input, shape index: {}]
  %s14 = inlined_call_operand.vmem [shape: bf16[64,32], index: 14, kind: input, shape index: {}]
  %s15 = inlined_call_operand.vmem [shape: f32[1,32], index: 15, kind: input, shape index: {}]
  %s16 = inlined_call_operand.vmem [shape: f32[1,32], index: 16, kind: input, shape index: {}]
  %s17 = inlined_call_operand.vmem [shape: f32[1,32], index: 17, kind: input, shape index: {}]
  %s18 = inlined_call_operand.vmem [shape: f32[1,32], index: 18, kind: input, shape index: {}]
  %s19 = inlined_call_operand.vmem [shape: f32[1,32], index: 19, kind: input, shape index: {}]
  %s20 = inlined_call_operand.hbm [shape: f32[2,8,32], index: 20, kind: output, shape index: {}]
  %s21 = sld [smem:[#allocation0]]
  $region141: #{tpu_custom_call.1} parent=0
    _
  %s23 = ssub.s32 1, %s21
  %s24 = scalar_select 0, %s23, %s21
  $region1: #{tpu_custom_call.1} parent=0
    #allocation6 [shape = 'u8[8192]{0}', space=vmem, size = 0x2000, scoped, tag = 'input window, operand 3']
    #allocation7 [shape = 's32[2]{0}', space=sflag, size = 0x8, scoped, tag = 'scoped memory for tpu_custom_call.1']
    #allocation8 [shape = 's32[2]{0}', space=sflag, size = 0x8, scoped, tag = 'scoped memory for tpu_custom_call.1']
    #allocation9 [shape = 'u8[8192]{0}', space=vmem, size = 0x2000, scoped, tag = 'input window, operand 4, single buffered']
    #allocation10 [shape = 's32[1]{0}', space=sflag, size = 0x4, scoped, tag = 'scoped memory for tpu_custom_call.1']
    #allocation11 [shape = 'u8[8192]{0}', space=vmem, size = 0x2000, scoped, tag = 'input window, operand 6, single buffered']
    #allocation12 [shape = 'u8[8192]{0}', space=vmem, size = 0x2000, scoped, tag = 'input window, operand 8, single buffered']
    #allocation13 [shape = 's32[1]{0}', space=sflag, size = 0x4, scoped, tag = 'scoped memory for tpu_custom_call.1']
    #allocation14 [shape = 'u8[512]{0}', space=vmem, size = 0x400, scoped, tag = 'input window, operand 9, single buffered']
    #allocation15 [shape = 'u8[8192]{0}', space=vmem, size = 0x2000, scoped, tag = 'input window, operand 12, single buffered']
    #allocation16 [shape = 's32[1]{0}', space=sflag, size = 0x4, scoped, tag = 'scoped memory for tpu_custom_call.1']
    #allocation17 [shape = 'u8[8192]{0}', space=vmem, size = 0x2000, scoped, tag = 'output window, operand 0']
    %25 = vsyncpa [#allocation7], 0
    %s26 = scalar_lea.sflag [#allocation7], 1
    %27 = vsyncpa %s26, 0
    %28 = vsyncpa [#allocation10], 0
    %29 = vsyncpa [#allocation13], 0
    %30 = vsyncpa [#allocation16], 0
    %31 = vsyncpa [#allocation8], 0
    %s32 = scalar_lea.sflag [#allocation8], 1
    %33 = vsyncpa %s32, 0
    loop: start=0, step=1, limit=4
    $region2: #{tpu_custom_call.1} parent=1 // loop_pre_header
      _
    $region3: #{tpu_custom_call.1} parent=1 // loop_header
      %s35 = sphi 0, %s39
      %p36 = scmp.ge.s32.totalorder %s35, 4
      %s42 = sphi 0, %s54
      %s43 = sphi 0, %s50
      %s44 = sphi 0, %s42
      %s45 = sphi 0, %s43
      %s46 = sphi 0, %s44
      %s47 = sphi 0, %s45
      %s57 = sphi 0, %s59
      %s60 = sphi 0, %s57
      %s61 = sphi 0, %s60
      %s77 = sphi 0, %s61
      %s83 = sphi 0, %s85
      %s86 = sphi 0, %s83
      %s87 = sphi 0, %s86
      %s103 = sphi 0, %s87
      %s111 = sphi 0, %s113
      %s114 = sphi 0, %s111
      %s115 = sphi 0, %s114
      %s131 = sphi 0, %s115
      %s139 = sphi 0, %s141
      %s142 = sphi 0, %s139
      %s143 = sphi 0, %s142
      %s159 = sphi 0, %s143
      %s163 = sphi 0, %s163
      %s165 = sphi 0, %s163
      %s166 = sphi 0, %s165
      %s180 = sphi 0, %s166
      %s184 = sphi 0, %s184
      %s186 = sphi 0, %s184
      %s187 = sphi 0, %s186
      %s201 = sphi 0, %s187
      %s205 = sphi 0, %s205
      %s207 = sphi 0, %s205
      %s208 = sphi 0, %s207
      %s222 = sphi 0, %s208
      %s226 = sphi 0, %s226
      %s228 = sphi 0, %s226
      %s229 = sphi 0, %s228
      %s243 = sphi 0, %s229
      %s247 = sphi 0, %s247
      %s249 = sphi 0, %s247
      %s250 = sphi 0, %s249
      %s264 = sphi 0, %s250
      %s268 = sphi 0, %s268
      %s270 = sphi 0, %s268
      %s271 = sphi 0, %s270
      %s285 = sphi 0, %s271
      %s289 = sphi 0, %s289
      %s291 = sphi 0, %s289
      %s292 = sphi 0, %s291
      %s306 = sphi 0, %s292
      %s310 = sphi 0, %s310
      %s312 = sphi 0, %s310
      %s313 = sphi 0, %s312
      %s327 = sphi 0, %s313
      %s331 = sphi 0, %s331
      %s333 = sphi 0, %s331
      %s334 = sphi 0, %s333
      %s348 = sphi 0, %s334
      %s352 = sphi 0, %s352
      %s354 = sphi 0, %s352
      %s355 = sphi 0, %s354
      %s369 = sphi 0, %s355
      %s373 = sphi 0, %s373
      %s375 = sphi 0, %s373
      %s376 = sphi 0, %s375
      %s390 = sphi 0, %s376
      %s394 = sphi 0, %s394
      %s396 = sphi 0, %s394
      %s397 = sphi 0, %s396
      %s411 = sphi 0, %s397
      %s415 = sphi 0, %s415
      %s417 = sphi 0, %s415
      %s418 = sphi 0, %s417
      %s432 = sphi 0, %s418
      %s436 = sphi 0, %s436
      %s438 = sphi 0, %s436
      %s439 = sphi 0, %s438
      %s453 = sphi 0, %s439
      %s457 = sphi 0, %s457
      %s459 = sphi 0, %s457
      %s460 = sphi 0, %s459
      %s474 = sphi 0, %s460
      %s478 = sphi 0, %s478
      %s480 = sphi 0, %s478
      %s481 = sphi 0, %s480
      %s495 = sphi 0, %s481
      %s503 = sphi 0, %s505
      %s506 = sphi 0, %s503
      %s507 = sphi 0, %s506
      %s523 = sphi 0, %s507
    $region4: #{tpu_custom_call.1} parent=1 // loop_header_branch
      %38 = sbr.rel (%p36) target = $region8
    $region5: #{tpu_custom_call.1} parent=1 // loop_body
      %s40 = ssub.s32 %s35, 1
      %s41 = ssub.s32 %s35, 2
      %s48 = sadd.s32 1, %s43
      %p49 = scmp.ge.s32.totalorder %s48, 1
      %s50 = scalar_select %p49, 0, %s48
      %s51 = sadd.s32 1, %s42
      %s52 = scalar_select %p49, %s51, %s42
      %p53 = scmp.ge.s32.totalorder %s52, 2
      %s54 = scalar_select %p53, 0, %s52
      %s55 = ssub.s32 %s42, %s54
      %p56 = scmp.eq.s32.totalorder %s55, 0
      %s58 = sadd.s32 %s57, 1
      %s59 = scalar_select %p56, %s57, %s58
      %p62 = pneg %p56
      %p63 = scmp.eq.s32.totalorder %s35, 1
      %p64 = por %p62, %p63
      %p65 = scmp.ne.s32.totalorder %s57, %s60
      %p66 = scmp.eq.s32.totalorder %s35, 0
      %p67 = por %p65, %p66
      %p68 = scmp.ne.s32.totalorder %s57, %s60
      %p69 = scmp.eq.s32.totalorder %s40, 1
      %p70 = por %p68, %p69
      %p71 = scmp.ne.s32.totalorder %s60, %s61
      %p72 = scmp.eq.s32.totalorder %s40, 0
      %p73 = por %p71, %p72
      %p74 = scmp.ne.s32.totalorder %s60, %s61
      %p75 = scmp.eq.s32.totalorder %s41, 1
      %p76 = por %p74, %p75
      %p78 = scmp.ne.s32.totalorder %s61, %s77
      %p79 = scmp.eq.s32.totalorder %s41, 0
      %p80 = por %p78, %p79
      %s81 = ssub.s32 %s42, %s54
      %p82 = scmp.eq.s32.totalorder %s81, 0
      %s84 = sadd.s32 %s83, 1
      %s85 = scalar_select %p82, %s83, %s84
      %p88 = pneg %p82
      %p89 = scmp.eq.s32.totalorder %s35, 1
      %p90 = por %p88, %p89
      %p91 = scmp.ne.s32.totalorder %s83, %s86
      %p92 = scmp.eq.s32.totalorder %s35, 0
      %p93 = por %p91, %p92
      %p94 = scmp.ne.s32.totalorder %s83, %s86
      %p95 = scmp.eq.s32.totalorder %s40, 1
      %p96 = por %p94, %p95
      %p97 = scmp.ne.s32.totalorder %s86, %s87
      %p98 = scmp.eq.s32.totalorder %s40, 0
      %p99 = por %p97, %p98
      %p100 = scmp.ne.s32.totalorder %s86, %s87
      %p101 = scmp.eq.s32.totalorder %s41, 1
      %p102 = por %p100, %p101
      %p104 = scmp.ne.s32.totalorder %s87, %s103
      %p105 = scmp.eq.s32.totalorder %s41, 0
      %p106 = por %p104, %p105
      %s107 = ssub.s32 %s42, %s54
      %s108 = ssub.s32 %s43, %s50
      %s109 = sor.u32 %s107, %s108
      %p110 = scmp.eq.s32.totalorder %s109, 0
      %s112 = sadd.s32 %s111, 1
      %s113 = scalar_select %p110, %s111, %s112
      %p116 = pneg %p110
      %p117 = scmp.eq.s32.totalorder %s35, 1
      %p118 = por %p116, %p117
      %p119 = scmp.ne.s32.totalorder %s111, %s114
      %p120 = scmp.eq.s32.totalorder %s35, 0
      %p121 = por %p119, %p120
      %p122 = scmp.ne.s32.totalorder %s111, %s114
      %p123 = scmp.eq.s32.totalorder %s40, 1
      %p124 = por %p122, %p123
      %p125 = scmp.ne.s32.totalorder %s114, %s115
      %p126 = scmp.eq.s32.totalorder %s40, 0
      %p127 = por %p125, %p126
      %p128 = scmp.ne.s32.totalorder %s114, %s115
      %p129 = scmp.eq.s32.totalorder %s41, 1
      %p130 = por %p128, %p129
      %p132 = scmp.ne.s32.totalorder %s115, %s131
      %p133 = scmp.eq.s32.totalorder %s41, 0
      %p134 = por %p132, %p133
      %s135 = ssub.s32 %s42, %s54
      %s136 = ssub.s32 %s43, %s50
      %s137 = sor.u32 %s135, %s136
      %p138 = scmp.eq.s32.totalorder %s137, 0
      %s140 = sadd.s32 %s139, 1
      %s141 = scalar_select %p138, %s139, %s140
      %p144 = pneg %p138
      %p145 = scmp.eq.s32.totalorder %s35, 1
      %p146 = por %p144, %p145
      %p147 = scmp.ne.s32.totalorder %s139, %s142
      %p148 = scmp.eq.s32.totalorder %s35, 0
      %p149 = por %p147, %p148
      %p150 = scmp.ne.s32.totalorder %s139, %s142
      %p151 = scmp.eq.s32.totalorder %s40, 1
      %p152 = por %p150, %p151
      %p153 = scmp.ne.s32.totalorder %s142, %s143
      %p154 = scmp.eq.s32.totalorder %s40, 0
      %p155 = por %p153, %p154
      %p156 = scmp.ne.s32.totalorder %s142, %s143
      %p157 = scmp.eq.s32.totalorder %s41, 1
      %p158 = por %p156, %p157
      %p160 = scmp.ne.s32.totalorder %s143, %s159
      %p161 = scmp.eq.s32.totalorder %s41, 0
      %p162 = por %p160, %p161
      %s164 = sadd.s32 %s163, 1
      %p167 = scmp.eq.s32.totalorder %s35, 1
      %p168 = scmp.ne.s32.totalorder %s163, %s165
      %p169 = scmp.eq.s32.totalorder %s35, 0
      %p170 = por %p168, %p169
      %p171 = scmp.ne.s32.totalorder %s163, %s165
      %p172 = scmp.eq.s32.totalorder %s40, 1
      %p173 = por %p171, %p172
      %p174 = scmp.ne.s32.totalorder %s165, %s166
      %p175 = scmp.eq.s32.totalorder %s40, 0
      %p176 = por %p174, %p175
      %p177 = scmp.ne.s32.totalorder %s165, %s166
      %p178 = scmp.eq.s32.totalorder %s41, 1
      %p179 = por %p177, %p178
      %p181 = scmp.ne.s32.totalorder %s166, %s180
      %p182 = scmp.eq.s32.totalorder %s41, 0
      %p183 = por %p181, %p182
      %s185 = sadd.s32 %s184, 1
      %p188 = scmp.eq.s32.totalorder %s35, 1
      %p189 = scmp.ne.s32.totalorder %s184, %s186
      %p190 = scmp.eq.s32.totalorder %s35, 0
      %p191 = por %p189, %p190
      %p192 = scmp.ne.s32.totalorder %s184, %s186
      %p193 = scmp.eq.s32.totalorder %s40, 1
      %p194 = por %p192, %p193
      %p195 = scmp.ne.s32.totalorder %s186, %s187
      %p196 = scmp.eq.s32.totalorder %s40, 0
      %p197 = por %p195, %p196
      %p198 = scmp.ne.s32.totalorder %s186, %s187
      %p199 = scmp.eq.s32.totalorder %s41, 1
      %p200 = por %p198, %p199
      %p202 = scmp.ne.s32.totalorder %s187, %s201
      %p203 = scmp.eq.s32.totalorder %s41, 0
      %p204 = por %p202, %p203
      %s206 = sadd.s32 %s205, 1
      %p209 = scmp.eq.s32.totalorder %s35, 1
      %p210 = scmp.ne.s32.totalorder %s205, %s207
      %p211 = scmp.eq.s32.totalorder %s35, 0
      %p212 = por %p210, %p211
      %p213 = scmp.ne.s32.totalorder %s205, %s207
      %p214 = scmp.eq.s32.totalorder %s40, 1
      %p215 = por %p213, %p214
      %p216 = scmp.ne.s32.totalorder %s207, %s208
      %p217 = scmp.eq.s32.totalorder %s40, 0
      %p218 = por %p216, %p217
      %p219 = scmp.ne.s32.totalorder %s207, %s208
      %p220 = scmp.eq.s32.totalorder %s41, 1
      %p221 = por %p219, %p220
      %p223 = scmp.ne.s32.totalorder %s208, %s222
      %p224 = scmp.eq.s32.totalorder %s41, 0
      %p225 = por %p223, %p224
      %s227 = sadd.s32 %s226, 1
      %p230 = scmp.eq.s32.totalorder %s35, 1
      %p231 = scmp.ne.s32.totalorder %s226, %s228
      %p232 = scmp.eq.s32.totalorder %s35, 0
      %p233 = por %p231, %p232
      %p234 = scmp.ne.s32.totalorder %s226, %s228
      %p235 = scmp.eq.s32.totalorder %s40, 1
      %p236 = por %p234, %p235
      %p237 = scmp.ne.s32.totalorder %s228, %s229
      %p238 = scmp.eq.s32.totalorder %s40, 0
      %p239 = por %p237, %p238
      %p240 = scmp.ne.s32.totalorder %s228, %s229
      %p241 = scmp.eq.s32.totalorder %s41, 1
      %p242 = por %p240, %p241
      %p244 = scmp.ne.s32.totalorder %s229, %s243
      %p245 = scmp.eq.s32.totalorder %s41, 0
      %p246 = por %p244, %p245
      %s248 = sadd.s32 %s247, 1
      %p251 = scmp.eq.s32.totalorder %s35, 1
      %p252 = scmp.ne.s32.totalorder %s247, %s249
      %p253 = scmp.eq.s32.totalorder %s35, 0
      %p254 = por %p252, %p253
      %p255 = scmp.ne.s32.totalorder %s247, %s249
      %p256 = scmp.eq.s32.totalorder %s40, 1
      %p257 = por %p255, %p256
      %p258 = scmp.ne.s32.totalorder %s249, %s250
      %p259 = scmp.eq.s32.totalorder %s40, 0
      %p260 = por %p258, %p259
      %p261 = scmp.ne.s32.totalorder %s249, %s250
      %p262 = scmp.eq.s32.totalorder %s41, 1
      %p263 = por %p261, %p262
      %p265 = scmp.ne.s32.totalorder %s250, %s264
      %p266 = scmp.eq.s32.totalorder %s41, 0
      %p267 = por %p265, %p266
      %s269 = sadd.s32 %s268, 1
      %p272 = scmp.eq.s32.totalorder %s35, 1
      %p273 = scmp.ne.s32.totalorder %s268, %s270
      %p274 = scmp.eq.s32.totalorder %s35, 0
      %p275 = por %p273, %p274
      %p276 = scmp.ne.s32.totalorder %s268, %s270
      %p277 = scmp.eq.s32.totalorder %s40, 1
      %p278 = por %p276, %p277
      %p279 = scmp.ne.s32.totalorder %s270, %s271
      %p280 = scmp.eq.s32.totalorder %s40, 0
      %p281 = por %p279, %p280
      %p282 = scmp.ne.s32.totalorder %s270, %s271
      %p283 = scmp.eq.s32.totalorder %s41, 1
      %p284 = por %p282, %p283
      %p286 = scmp.ne.s32.totalorder %s271, %s285
      %p287 = scmp.eq.s32.totalorder %s41, 0
      %p288 = por %p286, %p287
      %s290 = sadd.s32 %s289, 1
      %p293 = scmp.eq.s32.totalorder %s35, 1
      %p294 = scmp.ne.s32.totalorder %s289, %s291
      %p295 = scmp.eq.s32.totalorder %s35, 0
      %p296 = por %p294, %p295
      %p297 = scmp.ne.s32.totalorder %s289, %s291
      %p298 = scmp.eq.s32.totalorder %s40, 1
      %p299 = por %p297, %p298
      %p300 = scmp.ne.s32.totalorder %s291, %s292
      %p301 = scmp.eq.s32.totalorder %s40, 0
      %p302 = por %p300, %p301
      %p303 = scmp.ne.s32.totalorder %s291, %s292
      %p304 = scmp.eq.s32.totalorder %s41, 1
      %p305 = por %p303, %p304
      %p307 = scmp.ne.s32.totalorder %s292, %s306
      %p308 = scmp.eq.s32.totalorder %s41, 0
      %p309 = por %p307, %p308
      %s311 = sadd.s32 %s310, 1
      %p314 = scmp.eq.s32.totalorder %s35, 1
      %p315 = scmp.ne.s32.totalorder %s310, %s312
      %p316 = scmp.eq.s32.totalorder %s35, 0
      %p317 = por %p315, %p316
      %p318 = scmp.ne.s32.totalorder %s310, %s312
      %p319 = scmp.eq.s32.totalorder %s40, 1
      %p320 = por %p318, %p319
      %p321 = scmp.ne.s32.totalorder %s312, %s313
      %p322 = scmp.eq.s32.totalorder %s40, 0
      %p323 = por %p321, %p322
      %p324 = scmp.ne.s32.totalorder %s312, %s313
      %p325 = scmp.eq.s32.totalorder %s41, 1
      %p326 = por %p324, %p325
      %p328 = scmp.ne.s32.totalorder %s313, %s327
      %p329 = scmp.eq.s32.totalorder %s41, 0
      %p330 = por %p328, %p329
      %s332 = sadd.s32 %s331, 1
      %p335 = scmp.eq.s32.totalorder %s35, 1
      %p336 = scmp.ne.s32.totalorder %s331, %s333
      %p337 = scmp.eq.s32.totalorder %s35, 0
      %p338 = por %p336, %p337
      %p339 = scmp.ne.s32.totalorder %s331, %s333
      %p340 = scmp.eq.s32.totalorder %s40, 1
      %p341 = por %p339, %p340
      %p342 = scmp.ne.s32.totalorder %s333, %s334
      %p343 = scmp.eq.s32.totalorder %s40, 0
      %p344 = por %p342, %p343
      %p345 = scmp.ne.s32.totalorder %s333, %s334
      %p346 = scmp.eq.s32.totalorder %s41, 1
      %p347 = por %p345, %p346
      %p349 = scmp.ne.s32.totalorder %s334, %s348
      %p350 = scmp.eq.s32.totalorder %s41, 0
      %p351 = por %p349, %p350
      %s353 = sadd.s32 %s352, 1
      %p356 = scmp.eq.s32.totalorder %s35, 1
      %p357 = scmp.ne.s32.totalorder %s352, %s354
      %p358 = scmp.eq.s32.totalorder %s35, 0
      %p359 = por %p357, %p358
      %p360 = scmp.ne.s32.totalorder %s352, %s354
      %p361 = scmp.eq.s32.totalorder %s40, 1
      %p362 = por %p360, %p361
      %p363 = scmp.ne.s32.totalorder %s354, %s355
      %p364 = scmp.eq.s32.totalorder %s40, 0
      %p365 = por %p363, %p364
      %p366 = scmp.ne.s32.totalorder %s354, %s355
      %p367 = scmp.eq.s32.totalorder %s41, 1
      %p368 = por %p366, %p367
      %p370 = scmp.ne.s32.totalorder %s355, %s369
      %p371 = scmp.eq.s32.totalorder %s41, 0
      %p372 = por %p370, %p371
      %s374 = sadd.s32 %s373, 1
      %p377 = scmp.eq.s32.totalorder %s35, 1
      %p378 = scmp.ne.s32.totalorder %s373, %s375
      %p379 = scmp.eq.s32.totalorder %s35, 0
      %p380 = por %p378, %p379
      %p381 = scmp.ne.s32.totalorder %s373, %s375
      %p382 = scmp.eq.s32.totalorder %s40, 1
      %p383 = por %p381, %p382
      %p384 = scmp.ne.s32.totalorder %s375, %s376
      %p385 = scmp.eq.s32.totalorder %s40, 0
      %p386 = por %p384, %p385
      %p387 = scmp.ne.s32.totalorder %s375, %s376
      %p388 = scmp.eq.s32.totalorder %s41, 1
      %p389 = por %p387, %p388
      %p391 = scmp.ne.s32.totalorder %s376, %s390
      %p392 = scmp.eq.s32.totalorder %s41, 0
      %p393 = por %p391, %p392
      %s395 = sadd.s32 %s394, 1
      %p398 = scmp.eq.s32.totalorder %s35, 1
      %p399 = scmp.ne.s32.totalorder %s394, %s396
      %p400 = scmp.eq.s32.totalorder %s35, 0
      %p401 = por %p399, %p400
      %p402 = scmp.ne.s32.totalorder %s394, %s396
      %p403 = scmp.eq.s32.totalorder %s40, 1
      %p404 = por %p402, %p403
      %p405 = scmp.ne.s32.totalorder %s396, %s397
      %p406 = scmp.eq.s32.totalorder %s40, 0
      %p407 = por %p405, %p406
      %p408 = scmp.ne.s32.totalorder %s396, %s397
      %p409 = scmp.eq.s32.totalorder %s41, 1
      %p410 = por %p408, %p409
      %p412 = scmp.ne.s32.totalorder %s397, %s411
      %p413 = scmp.eq.s32.totalorder %s41, 0
      %p414 = por %p412, %p413
      %s416 = sadd.s32 %s415, 1
      %p419 = scmp.eq.s32.totalorder %s35, 1
      %p420 = scmp.ne.s32.totalorder %s415, %s417
      %p421 = scmp.eq.s32.totalorder %s35, 0
      %p422 = por %p420, %p421
      %p423 = scmp.ne.s32.totalorder %s415, %s417
      %p424 = scmp.eq.s32.totalorder %s40, 1
      %p425 = por %p423, %p424
      %p426 = scmp.ne.s32.totalorder %s417, %s418
      %p427 = scmp.eq.s32.totalorder %s40, 0
      %p428 = por %p426, %p427
      %p429 = scmp.ne.s32.totalorder %s417, %s418
      %p430 = scmp.eq.s32.totalorder %s41, 1
      %p431 = por %p429, %p430
      %p433 = scmp.ne.s32.totalorder %s418, %s432
      %p434 = scmp.eq.s32.totalorder %s41, 0
      %p435 = por %p433, %p434
      %s437 = sadd.s32 %s436, 1
      %p440 = scmp.eq.s32.totalorder %s35, 1
      %p441 = scmp.ne.s32.totalorder %s436, %s438
      %p442 = scmp.eq.s32.totalorder %s35, 0
      %p443 = por %p441, %p442
      %p444 = scmp.ne.s32.totalorder %s436, %s438
      %p445 = scmp.eq.s32.totalorder %s40, 1
      %p446 = por %p444, %p445
      %p447 = scmp.ne.s32.totalorder %s438, %s439
      %p448 = scmp.eq.s32.totalorder %s40, 0
      %p449 = por %p447, %p448
      %p450 = scmp.ne.s32.totalorder %s438, %s439
      %p451 = scmp.eq.s32.totalorder %s41, 1
      %p452 = por %p450, %p451
      %p454 = scmp.ne.s32.totalorder %s439, %s453
      %p455 = scmp.eq.s32.totalorder %s41, 0
      %p456 = por %p454, %p455
      %s458 = sadd.s32 %s457, 1
      %p461 = scmp.eq.s32.totalorder %s35, 1
      %p462 = scmp.ne.s32.totalorder %s457, %s459
      %p463 = scmp.eq.s32.totalorder %s35, 0
      %p464 = por %p462, %p463
      %p465 = scmp.ne.s32.totalorder %s457, %s459
      %p466 = scmp.eq.s32.totalorder %s40, 1
      %p467 = por %p465, %p466
      %p468 = scmp.ne.s32.totalorder %s459, %s460
      %p469 = scmp.eq.s32.totalorder %s40, 0
      %p470 = por %p468, %p469
      %p471 = scmp.ne.s32.totalorder %s459, %s460
      %p472 = scmp.eq.s32.totalorder %s41, 1
      %p473 = por %p471, %p472
      %p475 = scmp.ne.s32.totalorder %s460, %s474
      %p476 = scmp.eq.s32.totalorder %s41, 0
      %p477 = por %p475, %p476
      %s479 = sadd.s32 %s478, 1
      %p482 = scmp.eq.s32.totalorder %s35, 1
      %p483 = scmp.ne.s32.totalorder %s478, %s480
      %p484 = scmp.eq.s32.totalorder %s35, 0
      %p485 = por %p483, %p484
      %p486 = scmp.ne.s32.totalorder %s478, %s480
      %p487 = scmp.eq.s32.totalorder %s40, 1
      %p488 = por %p486, %p487
      %p489 = scmp.ne.s32.totalorder %s480, %s481
      %p490 = scmp.eq.s32.totalorder %s40, 0
      %p491 = por %p489, %p490
      %p492 = scmp.ne.s32.totalorder %s480, %s481
      %p493 = scmp.eq.s32.totalorder %s41, 1
      %p494 = por %p492, %p493
      %p496 = scmp.ne.s32.totalorder %s481, %s495
      %p497 = scmp.eq.s32.totalorder %s41, 0
      %p498 = por %p496, %p497
      %s499 = ssub.s32 %s42, %s54
      %s500 = ssub.s32 %s43, %s50
      %s501 = sor.u32 %s499, %s500
      %p502 = scmp.eq.s32.totalorder %s501, 0
      %s504 = sadd.s32 %s503, 1
      %s505 = scalar_select %p502, %s503, %s504
      %p508 = pneg %p502
      %p509 = scmp.eq.s32.totalorder %s35, 1
      %p510 = por %p508, %p509
      %p511 = scmp.ne.s32.totalorder %s503, %s506
      %p512 = scmp.eq.s32.totalorder %s35, 0
      %p513 = por %p511, %p512
      %p514 = scmp.ne.s32.totalorder %s503, %s506
      %p515 = scmp.eq.s32.totalorder %s40, 1
      %p516 = por %p514, %p515
      %p517 = scmp.ne.s32.totalorder %s506, %s507
      %p518 = scmp.eq.s32.totalorder %s40, 0
      %p519 = por %p517, %p518
      %p520 = scmp.ne.s32.totalorder %s506, %s507
      %p521 = scmp.eq.s32.totalorder %s41, 1
      %p522 = por %p520, %p521
      %p524 = scmp.ne.s32.totalorder %s507, %s523
      %p525 = scmp.eq.s32.totalorder %s41, 0
      %p526 = por %p524, %p525
      %p527 = scmp.le.s32.totalorder 1, %s35
      %p528 = scmp.lt.s32.totalorder %s35, 3
      %p529 = pnand %p527, %p528
      %p530 = pneg %p529
      // Predicated region
      $region9: #{tpu_custom_call.1} parent=5 // pred_check
        _
      $region10: #{tpu_custom_call.1} parent=5 // pred_check_branch
        %532 = sbr.rel (%p529) target = $region12
      $region11: #{tpu_custom_call.1} parent=5 // pred_region
        %s533 = ssub.s32 %s35, 1
        // Predicated region
        $region13: #{tpu_custom_call.1} parent=11 // pred_check
          %p534 = pneg %p176
        $region14: #{tpu_custom_call.1} parent=11 // pred_check_branch
          %536 = sbr.rel (%p534) target = $region16
        $region15: #{tpu_custom_call.1} parent=11 // pred_region
          %s538 = ssub.s32 256, 256
          %539 = vsyncadd [#allocation10], %s538
          %s540 = sshll.u32 [#allocation9], 4
          %s541 = int_to_ptr.vmem [resolvable:$true] %s540
          %546 = dma.hbm_to_vmem [thread:$0]  %s4, 256, %s541, [#allocation10], 64, 64, 4
        $region16: #{tpu_custom_call.1} parent=11 // pred_fallthru
          _
        // Predicated region
        $region17: #{tpu_custom_call.1} parent=11 // pred_check
          %p547 = pneg %p197
        $region18: #{tpu_custom_call.1} parent=11 // pred_check_branch
          %549 = sbr.rel (%p547) target = $region20
        $region19: #{tpu_custom_call.1} parent=11 // pred_region
          _
        $region20: #{tpu_custom_call.1} parent=11 // pred_fallthru
          _
        // Predicated region
        $region21: #{tpu_custom_call.1} parent=11 // pred_check
          %p550 = pneg %p218
        $region22: #{tpu_custom_call.1} parent=11 // pred_check_branch
          %552 = sbr.rel (%p550) target = $region24
        $region23: #{tpu_custom_call.1} parent=11 // pred_region
          %s554 = ssub.s32 256, 256
          %555 = vsyncadd [#allocation10], %s554
          %s556 = sshll.u32 [#allocation11], 4
          %s557 = int_to_ptr.vmem [resolvable:$true] %s556
          %562 = dma.hbm_to_vmem [thread:$0]  %s6, 256, %s557, [#allocation10], 64, 64, 4
        $region24: #{tpu_custom_call.1} parent=11 // pred_fallthru
          _
        // Predicated region
        $region25: #{tpu_custom_call.1} parent=11 // pred_check
          %p563 = pneg %p239
        $region26: #{tpu_custom_call.1} parent=11 // pred_check_branch
          %565 = sbr.rel (%p563) target = $region28
        $region27: #{tpu_custom_call.1} parent=11 // pred_region
          _
        $region28: #{tpu_custom_call.1} parent=11 // pred_fallthru
          _
        // Predicated region
        $region29: #{tpu_custom_call.1} parent=11 // pred_check
          %p566 = pneg %p260
        $region30: #{tpu_custom_call.1} parent=11 // pred_check_branch
          %568 = sbr.rel (%p566) target = $region32
        $region31: #{tpu_custom_call.1} parent=11 // pred_region
          %s570 = ssub.s32 256, 256
          %571 = vsyncadd [#allocation13], %s570
          %s572 = sshll.u32 [#allocation12], 4
          %s573 = int_to_ptr.vmem [resolvable:$true] %s572
          %578 = dma.hbm_to_vmem [thread:$0]  %s8, 256, %s573, [#allocation13], 64, 64, 4
        $region32: #{tpu_custom_call.1} parent=11 // pred_fallthru
          _
        // Predicated region
        $region33: #{tpu_custom_call.1} parent=11 // pred_check
          %p579 = pneg %p281
        $region34: #{tpu_custom_call.1} parent=11 // pred_check_branch
          %581 = sbr.rel (%p579) target = $region36
        $region35: #{tpu_custom_call.1} parent=11 // pred_region
          %s583 = ssub.s32 16, 16
          %584 = vsyncadd [#allocation13], %s583
          %s586 = sshll.u32 [#allocation14], 4
          %s587 = int_to_ptr.vmem [resolvable:$true] %s586
          %589 = dma.hbm_to_vmem [thread:$0]  %s9, 16, %s587, [#allocation13]
        $region36: #{tpu_custom_call.1} parent=11 // pred_fallthru
          _
        // Predicated region
        $region37: #{tpu_custom_call.1} parent=11 // pred_check
          %p590 = pneg %p302
        $region38: #{tpu_custom_call.1} parent=11 // pred_check_branch
          %592 = sbr.rel (%p590) target = $region40
        $region39: #{tpu_custom_call.1} parent=11 // pred_region
          _
        $region40: #{tpu_custom_call.1} parent=11 // pred_fallthru
          _
        // Predicated region
        $region41: #{tpu_custom_call.1} parent=11 // pred_check
          %p593 = pneg %p323
        $region42: #{tpu_custom_call.1} parent=11 // pred_check_branch
          %595 = sbr.rel (%p593) target = $region44
        $region43: #{tpu_custom_call.1} parent=11 // pred_region
          _
        $region44: #{tpu_custom_call.1} parent=11 // pred_fallthru
          _
        // Predicated region
        $region45: #{tpu_custom_call.1} parent=11 // pred_check
          %p596 = pneg %p344
        $region46: #{tpu_custom_call.1} parent=11 // pred_check_branch
          %598 = sbr.rel (%p596) target = $region48
        $region47: #{tpu_custom_call.1} parent=11 // pred_region
          %s600 = ssub.s32 256, 256
          %601 = vsyncadd [#allocation16], %s600
          %s602 = sshll.u32 [#allocation15], 4
          %s603 = int_to_ptr.vmem [resolvable:$true] %s602
          %608 = dma.hbm_to_vmem [thread:$0]  %s12, 256, %s603, [#allocation16], 64, 64, 4
        $region48: #{tpu_custom_call.1} parent=11 // pred_fallthru
          _
        // Predicated region
        $region49: #{tpu_custom_call.1} parent=11 // pred_check
          %p609 = pneg %p365
        $region50: #{tpu_custom_call.1} parent=11 // pred_check_branch
          %611 = sbr.rel (%p609) target = $region52
        $region51: #{tpu_custom_call.1} parent=11 // pred_region
          _
        $region52: #{tpu_custom_call.1} parent=11 // pred_fallthru
          _
        // Predicated region
        $region53: #{tpu_custom_call.1} parent=11 // pred_check
          %p612 = pneg %p386
        $region54: #{tpu_custom_call.1} parent=11 // pred_check_branch
          %614 = sbr.rel (%p612) target = $region56
        $region55: #{tpu_custom_call.1} parent=11 // pred_region
          _
        $region56: #{tpu_custom_call.1} parent=11 // pred_fallthru
          _
        // Predicated region
        $region57: #{tpu_custom_call.1} parent=11 // pred_check
          %p615 = pneg %p407
        $region58: #{tpu_custom_call.1} parent=11 // pred_check_branch
          %617 = sbr.rel (%p615) target = $region60
        $region59: #{tpu_custom_call.1} parent=11 // pred_region
          _
        $region60: #{tpu_custom_call.1} parent=11 // pred_fallthru
          _
        // Predicated region
        $region61: #{tpu_custom_call.1} parent=11 // pred_check
          %p618 = pneg %p428
        $region62: #{tpu_custom_call.1} parent=11 // pred_check_branch
          %620 = sbr.rel (%p618) target = $region64
        $region63: #{tpu_custom_call.1} parent=11 // pred_region
          _
        $region64: #{tpu_custom_call.1} parent=11 // pred_fallthru
          _
        // Predicated region
        $region65: #{tpu_custom_call.1} parent=11 // pred_check
          %p621 = pneg %p449
        $region66: #{tpu_custom_call.1} parent=11 // pred_check_branch
          %623 = sbr.rel (%p621) target = $region68
        $region67: #{tpu_custom_call.1} parent=11 // pred_region
          _
        $region68: #{tpu_custom_call.1} parent=11 // pred_fallthru
          _
        // Predicated region
        $region69: #{tpu_custom_call.1} parent=11 // pred_check
          %p624 = pneg %p470
        $region70: #{tpu_custom_call.1} parent=11 // pred_check_branch
          %626 = sbr.rel (%p624) target = $region72
        $region71: #{tpu_custom_call.1} parent=11 // pred_region
          _
        $region72: #{tpu_custom_call.1} parent=11 // pred_fallthru
          _
        // Predicated region
        $region73: #{tpu_custom_call.1} parent=11 // pred_check
          %p627 = pneg %p491
        $region74: #{tpu_custom_call.1} parent=11 // pred_check_branch
          %629 = sbr.rel (%p627) target = $region76
        $region75: #{tpu_custom_call.1} parent=11 // pred_region
          _
        $region76: #{tpu_custom_call.1} parent=11 // pred_fallthru
          _
      $region12: #{tpu_custom_call.1} parent=5 // pred_fallthru
        _
      %p630 = scmp.lt.s32.totalorder %s35, 2
      // Predicated region
      $region77: #{tpu_custom_call.1} parent=5 // pred_check
        %p631 = pneg %p630
      $region78: #{tpu_custom_call.1} parent=5 // pred_check_branch
        %633 = sbr.rel (%p631) target = $region80
      $region79: #{tpu_custom_call.1} parent=5 // pred_region
        // Predicated region
        $region81: #{tpu_custom_call.1} parent=79 // pred_check
          %p634 = pneg %p67
        $region82: #{tpu_custom_call.1} parent=79 // pred_check_branch
          %636 = sbr.rel (%p634) target = $region84
        $region83: #{tpu_custom_call.1} parent=79 // pred_region
          %p637 = scmp.lt.s32.totalorder %s42, 1
          %s638 = scalar_select %p637, %s42, 1
          %s639 = smul.addr %s638, 8
          %s640 = scalar_lea.vmem %s0, %s639
        $region84: #{tpu_custom_call.1} parent=79 // pred_fallthru
          _
        // Predicated region
        $region85: #{tpu_custom_call.1} parent=79 // pred_check
          %p641 = pneg %p93
        $region86: #{tpu_custom_call.1} parent=79 // pred_check_branch
          %643 = sbr.rel (%p641) target = $region88
        $region87: #{tpu_custom_call.1} parent=79 // pred_region
          %p644 = scmp.lt.s32.totalorder %s42, 1
          %s645 = scalar_select %p644, %s42, 1
          %s646 = smul.addr %s645, 8
          %s647 = scalar_lea.vmem %s1, %s646
        $region88: #{tpu_custom_call.1} parent=79 // pred_fallthru
          _
        // Predicated region
        $region89: #{tpu_custom_call.1} parent=79 // pred_check
          %p648 = pneg %p121
        $region90: #{tpu_custom_call.1} parent=79 // pred_check_branch
          %650 = sbr.rel (%p648) target = $region92
        $region91: #{tpu_custom_call.1} parent=79 // pred_region
          %p651 = scmp.lt.s32.totalorder %s42, 1
          %s652 = scalar_select %p651, %s42, 1
          %p653 = scmp.lt.s32.totalorder %s43, 0
          %s654 = scalar_select %p653, %s43, 0
          %s655 = sadd.s32 %s654, %s652
          %s656 = smul.addr %s655, 8
          %s657 = scalar_lea.vmem %s2, %s656
        $region92: #{tpu_custom_call.1} parent=79 // pred_fallthru
          _
        // Predicated region
        $region93: #{tpu_custom_call.1} parent=79 // pred_check
          %p658 = pneg %p149
        $region94: #{tpu_custom_call.1} parent=79 // pred_check_branch
          %660 = sbr.rel (%p658) target = $region96
        $region95: #{tpu_custom_call.1} parent=79 // pred_region
          %s661 = sand.u32 %s139, 1
          %s662 = scalar_lea.sflag [#allocation7], %s661
          %s663 = sand.u32 %s139, 1
          %s664 = smul.addr %s663, 8
          %s665 = scalar_lea.vmem [#allocation6], %s664
          %s667 = ssub.s32 128, 128
          %668 = vsyncadd %s662, %s667
          %s669 = sadd.s32 %s43, %s42
          %s670 = smul.addr %s669, 128
          %s671 = scalar_lea.hbm %s3, %s670
          %s673 = sshll.u32 %s665, 4
          %s674 = int_to_ptr.vmem [resolvable:$true] %s673
          %676 = dma.hbm_to_vmem [thread:$0]  %s671, 128, %s674, %s662
        $region96: #{tpu_custom_call.1} parent=79 // pred_fallthru
          _
      $region80: #{tpu_custom_call.1} parent=5 // pred_fallthru
        _
      %p677 = scmp.le.s32.totalorder 1, %s35
      %p678 = scmp.lt.s32.totalorder %s35, 3
      %p679 = pnand %p677, %p678
      %p680 = pneg %p679
      // Predicated region
      $region97: #{tpu_custom_call.1} parent=5 // pred_check
        _
      $region98: #{tpu_custom_call.1} parent=5 // pred_check_branch
        %682 = sbr.rel (%p679) target = $region100
      $region99: #{tpu_custom_call.1} parent=5 // pred_region
        %s683 = ssub.s32 %s35, 1
        %s684 = sand.u32 %s142, 1
        %s685 = scalar_lea.sflag [#allocation7], %s684
        %s686 = sand.u32 %s142, 1
        %s687 = smul.addr %s686, 8
        %s688 = scalar_lea.vmem [#allocation6], %s687
        // Predicated region
        $region101: #{tpu_custom_call.1} parent=99 // pred_check
          %p689 = pneg %p155
        $region102: #{tpu_custom_call.1} parent=99 // pred_check_branch
          %691 = sbr.rel (%p689) target = $region104
        $region103: #{tpu_custom_call.1} parent=99 // pred_region
          %692 = dma.done %s685, 128
        $region104: #{tpu_custom_call.1} parent=99 // pred_fallthru
          _
        // Predicated region
        $region105: #{tpu_custom_call.1} parent=99 // pred_check
          %p693 = pneg %p176
        $region106: #{tpu_custom_call.1} parent=99 // pred_check_branch
          %695 = sbr.rel (%p693) target = $region108
        $region107: #{tpu_custom_call.1} parent=99 // pred_region
          %696 = dma.done [#allocation10], 256
        $region108: #{tpu_custom_call.1} parent=99 // pred_fallthru
          _
        // Predicated region
        $region109: #{tpu_custom_call.1} parent=99 // pred_check
          %p697 = pneg %p218
        $region110: #{tpu_custom_call.1} parent=99 // pred_check_branch
          %699 = sbr.rel (%p697) target = $region112
        $region111: #{tpu_custom_call.1} parent=99 // pred_region
          %700 = dma.done [#allocation10], 256
        $region112: #{tpu_custom_call.1} parent=99 // pred_fallthru
          _
        // Predicated region
        $region113: #{tpu_custom_call.1} parent=99 // pred_check
          %p701 = pneg %p260
        $region114: #{tpu_custom_call.1} parent=99 // pred_check_branch
          %703 = sbr.rel (%p701) target = $region116
        $region115: #{tpu_custom_call.1} parent=99 // pred_region
          %704 = dma.done [#allocation13], 256
        $region116: #{tpu_custom_call.1} parent=99 // pred_fallthru
          _
        // Predicated region
        $region117: #{tpu_custom_call.1} parent=99 // pred_check
          %p705 = pneg %p281
        $region118: #{tpu_custom_call.1} parent=99 // pred_check_branch
          %707 = sbr.rel (%p705) target = $region120
        $region119: #{tpu_custom_call.1} parent=99 // pred_region
          %708 = dma.done [#allocation13], 16
        $region120: #{tpu_custom_call.1} parent=99 // pred_fallthru
          _
        // Predicated region
        $region121: #{tpu_custom_call.1} parent=99 // pred_check
          %p709 = pneg %p344
        $region122: #{tpu_custom_call.1} parent=99 // pred_check_branch
          %711 = sbr.rel (%p709) target = $region124
        $region123: #{tpu_custom_call.1} parent=99 // pred_region
          %712 = dma.done [#allocation16], 256
        $region124: #{tpu_custom_call.1} parent=99 // pred_fallthru
          _
        %p713 = scmp.lt.s32.totalorder %s44, 1
        %s714 = scalar_select %p713, %s44, 1
        %s715 = smul.addr %s714, 8
        %s716 = scalar_lea.vmem %s0, %s715
        %p717 = pneg %p73
        %p718 = pneg %p70
        %p719 = scmp.lt.s32.totalorder %s44, 1
        %s720 = scalar_select %p719, %s44, 1
        %s721 = smul.addr %s720, 8
        %s722 = scalar_lea.vmem %s1, %s721
        %p723 = pneg %p99
        %p724 = pneg %p96
        %p725 = scmp.lt.s32.totalorder %s44, 1
        %s726 = scalar_select %p725, %s44, 1
        %p727 = scmp.lt.s32.totalorder %s45, 0
        %s728 = scalar_select %p727, %s45, 0
        %s729 = sadd.s32 %s728, %s726
        %s730 = smul.addr %s729, 8
        %s731 = scalar_lea.vmem %s2, %s730
        %p732 = pneg %p127
        %p733 = pneg %p124
        %s734 = sand.u32 %s142, 1
        %s735 = scalar_lea.sflag [#allocation7], %s734
        %s736 = sand.u32 %s142, 1
        %s737 = smul.addr %s736, 8
        %s738 = scalar_lea.vmem [#allocation6], %s737
        %p739 = pneg %p155
        %p740 = pneg %p152
        %p741 = pneg %p176
        %p742 = pneg %p173
        %p743 = pneg %p197
        %p744 = pneg %p194
        %p745 = pneg %p218
        %p746 = pneg %p215
        %p747 = pneg %p239
        %p748 = pneg %p236
        %p749 = pneg %p260
        %p750 = pneg %p257
        %p751 = pneg %p281
        %p752 = pneg %p278
        %p753 = pneg %p302
        %p754 = pneg %p299
        %p755 = pneg %p323
        %p756 = pneg %p320
        %p757 = pneg %p344
        %p758 = pneg %p341
        %p759 = pneg %p365
        %p760 = pneg %p362
        %p761 = pneg %p386
        %p762 = pneg %p383
        %p763 = pneg %p407
        %p764 = pneg %p404
        %p765 = pneg %p428
        %p766 = pneg %p425
        %p767 = pneg %p449
        %p768 = pneg %p446
        %p769 = pneg %p470
        %p770 = pneg %p467
        %p771 = pneg %p491
        %p772 = pneg %p488
        %p773 = pneg %p519
        %p774 = pneg %p516
        %s775 = sand.u32 %s506, 1
        %s776 = scalar_lea.sflag [#allocation8], %s775
        %s777 = sand.u32 %s506, 1
        %s778 = smul.addr %s777, 8
        %s779 = scalar_lea.vmem [#allocation17], %s778
        %p780 = scmp.lt.s32.totalorder %s44, 1
        %s781 = scalar_select %p780, %s44, 1
        %s782 = smul.addr %s781, 8
        %s783 = scalar_lea.vmem %s0, %s782
        %p784 = scmp.lt.s32.totalorder %s44, 1
        %s785 = scalar_select %p784, %s44, 1
        %s786 = smul.addr %s785, 8
        %s787 = scalar_lea.vmem %s1, %s786
        %p788 = scmp.lt.s32.totalorder %s44, 1
        %s789 = scalar_select %p788, %s44, 1
        %p790 = scmp.lt.s32.totalorder %s45, 0
        %s791 = scalar_select %p790, %s45, 0
        %s792 = sadd.s32 %s791, %s789
        %s793 = smul.addr %s792, 8
        %s794 = scalar_lea.vmem %s2, %s793
        %p796 = scmp.eq.s32.totalorder %s45, 0
        // Predicated region
        $region125: #{tpu_custom_call.1} parent=99 // pred_check
          %p797 = pneg %p796
        $region126: #{tpu_custom_call.1} parent=99 // pred_check_branch
          %799 = sbr.rel (%p797) target = $region128
        $region127: #{tpu_custom_call.1} parent=99 // pred_region
          %v800 = vld [vmem:[%s783] sm:$0xff]
          %v801 = vld [vmem:[%s787] sm:$0xff]
          %v802 = vadd.f32 %v800, %v801
          %v803 = vpack.c.bf16 %v802, %v802
          %v804 = vld [vmem:[#allocation11] sm:$0xf]
          %v805 = vld [vmem:[#allocation11 + $0x4] sm:$0xf]
          %v806 = vld [vmem:[#allocation11 + $0x8] sm:$0xf]
          %v807 = vld [vmem:[#allocation11 + $0xc] sm:$0xf]
          %v808 = vld [vmem:[%s7] sm:$0x1]
          %v810 = vlaneseq
          %v811 = vshrl.u32 %v810, 7
          %v812 = vsub.s32 0, %v811
          %v813 = vrot.slane %v808, %v812
          %v819 = vunpack.c.l.b16 %v804
          %v820 = vunpack.c.l.b16 %v805
          %v821 = vunpack.c.l.b16 %v806
          %v822 = vunpack.c.l.b16 %v807
          %v823 = vpack.c.b16 %v820, %v819
          %v824 = vpack.c.b16 %v822, %v821
          %vm827 = vcmask 261120
          %v829 = vsel %vm827, %v803, 0
          %831 = vmatprep.subr.bf16.mxu0 0
          %832 = vmatpush1.bf16.msra.mxu0 %v823
          %833 = vmatprep.subr.bf16.mxu0 0
          %834 = vmatpush1.bf16.msra.mxu0 %v824
          %835 = vmatprep.subr.bf16.mxu0 0
          %836 = vmatpush1.bf16.msra.mxu0 0
          %837 = vmatprep.subr.bf16.mxu0 0
          %838 = vmatpush1.bf16.msra.mxu0 0
          %839 = vmatprep.subr.bf16.mxu0 0
          %840 = vmatpush1.bf16.msra.mxu0 0
          %841 = vmatprep.subr.bf16.mxu0 0
          %842 = vmatpush1.bf16.msra.mxu0 0
          %843 = vmatprep.subr.bf16.mxu0 0
          %844 = vmatpush1.bf16.msra.mxu0 0
          %845 = vmatprep.subr.bf16.mxu0 0
          %846 = vmatpush1.bf16.msra.mxu0 0
          %847 = vmatprep.subr.bf16.mxu0 0
          %848 = vmatpush1.bf16.msra.mxu0 0
          %849 = vmatprep.subr.bf16.mxu0 0
          %850 = vmatpush1.bf16.msra.mxu0 0
          %851 = vmatprep.subr.bf16.mxu0 0
          %852 = vmatpush1.bf16.msra.mxu0 0
          %853 = vmatprep.subr.bf16.mxu0 0
          %854 = vmatpush1.bf16.msra.mxu0 0
          %855 = vmatprep.subr.bf16.mxu0 0
          %856 = vmatpush1.bf16.msra.mxu0 0
          %857 = vmatprep.subr.bf16.mxu0 0
          %858 = vmatpush1.bf16.msra.mxu0 0
          %859 = vmatprep.subr.bf16.mxu0 0
          %860 = vmatpush1.bf16.msra.mxu0 0
          %861 = vmatprep.subr.bf16.mxu0 0
          %862 = vmatpush1.bf16.msra.mxu0 0
          %863 = vmatprep.mubr.bf16.mxu0 0
          %864 = vmatmul.mubr.bf16.gmra.mrb[0].mxu0 %v829
          %v865 = vpop.f32.mrb[0].mxu0
          %v866 = vadd.f32 %v813, %v865
          %v867 = vpop.f32.mrb[0].mxu0
          %v868 = vpop.f32.mrb[0].mxu0
          %v869 = vpop.f32.mrb[0].mxu0
          %870 = vdwg.mxu0
          %v871 = vpack.c.bf16 %v800, %v800
          %v872 = vld [vmem:[#allocation12] sm:$0xf]
          %v873 = vld [vmem:[#allocation12 + $0x4] sm:$0xf]
          %v874 = vld [vmem:[#allocation12 + $0x8] sm:$0xf]
          %v875 = vld [vmem:[#allocation12 + $0xc] sm:$0xf]
          %v876 = vld [vmem:[#allocation14] sm:$0x1]
          %v878 = vlaneseq
          %v879 = vshrl.u32 %v878, 7
          %v880 = vsub.s32 0, %v879
          %v881 = vrot.slane %v876, %v880
          %v887 = vunpack.c.l.b16 %v872
          %v888 = vunpack.c.l.b16 %v873
          %v889 = vunpack.c.l.b16 %v874
          %v890 = vunpack.c.l.b16 %v875
          %v891 = vpack.c.b16 %v888, %v887
          %v892 = vpack.c.b16 %v890, %v889
          %v896 = vsel %vm827, %v871, 0
          %898 = vmatprep.subr.bf16.mxu0 0
          %899 = vmatpush1.bf16.msra.mxu0 %v891
          %900 = vmatprep.subr.bf16.mxu0 0
          %901 = vmatpush1.bf16.msra.mxu0 %v892
          %902 = vmatprep.subr.bf16.mxu0 0
          %903 = vmatpush1.bf16.msra.mxu0 0
          %904 = vmatprep.subr.bf16.mxu0 0
          %905 = vmatpush1.bf16.msra.mxu0 0
          %906 = vmatprep.subr.bf16.mxu0 0
          %907 = vmatpush1.bf16.msra.mxu0 0
          %908 = vmatprep.subr.bf16.mxu0 0
          %909 = vmatpush1.bf16.msra.mxu0 0
          %910 = vmatprep.subr.bf16.mxu0 0
          %911 = vmatpush1.bf16.msra.mxu0 0
          %912 = vmatprep.subr.bf16.mxu0 0
          %913 = vmatpush1.bf16.msra.mxu0 0
          %914 = vmatprep.subr.bf16.mxu0 0
          %915 = vmatpush1.bf16.msra.mxu0 0
          %916 = vmatprep.subr.bf16.mxu0 0
          %917 = vmatpush1.bf16.msra.mxu0 0
          %918 = vmatprep.subr.bf16.mxu0 0
          %919 = vmatpush1.bf16.msra.mxu0 0
          %920 = vmatprep.subr.bf16.mxu0 0
          %921 = vmatpush1.bf16.msra.mxu0 0
          %922 = vmatprep.subr.bf16.mxu0 0
          %923 = vmatpush1.bf16.msra.mxu0 0
          %924 = vmatprep.subr.bf16.mxu0 0
          %925 = vmatpush1.bf16.msra.mxu0 0
          %926 = vmatprep.subr.bf16.mxu0 0
          %927 = vmatpush1.bf16.msra.mxu0 0
          %928 = vmatprep.subr.bf16.mxu0 0
          %929 = vmatpush1.bf16.msra.mxu0 0
          %930 = vmatprep.mubr.bf16.mxu0 0
          %931 = vmatmul.mubr.bf16.gmra.mrb[0].mxu0 %v896
          %v932 = vpop.f32.mrb[0].mxu0
          %v933 = vadd.f32 %v881, %v932
          %v934 = vpop.f32.mrb[0].mxu0
          %v935 = vpop.f32.mrb[0].mxu0
          %v936 = vpop.f32.mrb[0].mxu0
          %937 = vdwg.mxu0
          %v938 = vpack.c.bf16 %v866, %v866
          %vm939 = vcmask 257024
          %940 = vst.msk [vmem:[#allocation2] sm:$0xf] %vm939, %v938
          %v941 = vpack.c.bf16 %v933, %v933
          %942 = vst.msk [vmem:[#allocation3] sm:$0xf] %vm939, %v941
        $region128: #{tpu_custom_call.1} parent=99 // pred_fallthru
          _
        %v943 = vld [vmem:[%s794] sm:$0xff]
        %v944 = vld [vmem:[%s688] sm:$0xff]
        %v945 = vadd.f32 %v943, %v944
        %v946 = vpack.c.bf16 %v945, %v945
        %v947 = vld [vmem:[#allocation9] sm:$0xf]
        %v948 = vld [vmem:[#allocation9 + $0x4] sm:$0xf]
        %v949 = vld [vmem:[#allocation9 + $0x8] sm:$0xf]
        %v950 = vld [vmem:[#allocation9 + $0xc] sm:$0xf]
        %v951 = vld [vmem:[%s5] sm:$0x1]
        %v953 = vlaneseq
        %v954 = vshrl.u32 %v953, 7
        %v955 = vsub.s32 0, %v954
        %v956 = vrot.slane %v951, %v955
        %v962 = vunpack.c.l.b16 %v947
        %v963 = vunpack.c.l.b16 %v948
        %v964 = vunpack.c.l.b16 %v949
        %v965 = vunpack.c.l.b16 %v950
        %v966 = vpack.c.b16 %v963, %v962
        %v967 = vpack.c.b16 %v965, %v964
        %vm970 = vcmask 261120
        %v972 = vsel %vm970, %v946, 0
        %974 = vmatprep.subr.bf16.mxu0 0
        %975 = vmatpush1.bf16.msra.mxu0 %v966
        %976 = vmatprep.subr.bf16.mxu0 0
        %977 = vmatpush1.bf16.msra.mxu0 %v967
        %978 = vmatprep.subr.bf16.mxu0 0
        %979 = vmatpush1.bf16.msra.mxu0 0
        %980 = vmatprep.subr.bf16.mxu0 0
        %981 = vmatpush1.bf16.msra.mxu0 0
        %982 = vmatprep.subr.bf16.mxu0 0
        %983 = vmatpush1.bf16.msra.mxu0 0
        %984 = vmatprep.subr.bf16.mxu0 0
        %985 = vmatpush1.bf16.msra.mxu0 0
        %986 = vmatprep.subr.bf16.mxu0 0
        %987 = vmatpush1.bf16.msra.mxu0 0
        %988 = vmatprep.subr.bf16.mxu0 0
        %989 = vmatpush1.bf16.msra.mxu0 0
        %990 = vmatprep.subr.bf16.mxu0 0
        %991 = vmatpush1.bf16.msra.mxu0 0
        %992 = vmatprep.subr.bf16.mxu0 0
        %993 = vmatpush1.bf16.msra.mxu0 0
        %994 = vmatprep.subr.bf16.mxu0 0
        %995 = vmatpush1.bf16.msra.mxu0 0
        %996 = vmatprep.subr.bf16.mxu0 0
        %997 = vmatpush1.bf16.msra.mxu0 0
        %998 = vmatprep.subr.bf16.mxu0 0
        %999 = vmatpush1.bf16.msra.mxu0 0
        %1000 = vmatprep.subr.bf16.mxu0 0
        %1001 = vmatpush1.bf16.msra.mxu0 0
        %1002 = vmatprep.subr.bf16.mxu0 0
        %1003 = vmatpush1.bf16.msra.mxu0 0
        %1004 = vmatprep.subr.bf16.mxu0 0
        %1005 = vmatpush1.bf16.msra.mxu0 0
        %1006 = vmatprep.mubr.bf16.mxu0 0
        %1007 = vmatmul.mubr.bf16.gmra.mrb[0].mxu0 %v972
        %v1008 = vpop.f32.mrb[0].mxu0
        %v1009 = vadd.f32 %v956, %v1008
        %v1010 = vpop.f32.mrb[0].mxu0
        %v1011 = vpop.f32.mrb[0].mxu0
        %v1012 = vpop.f32.mrb[0].mxu0
        %1013 = vdwg.mxu0
        %v1014 = vpack.c.bf16 %v1009, %v1009
        %vm1015 = vcmask 257024
        %1016 = vst.msk [vmem:[#allocation4] sm:$0xf] %vm1015, %v1014
        %v1017 = vld [vmem:[#allocation4] sm:$0xf]
        %v1018 = vld [vmem:[#allocation2] sm:$0xf]
        %vm1019 = vcmask 64512
        %v1021 = vsel %vm1019, %v1017, 0
        %v1024 = vsel %vm1019, %v1018, 0
        %1026 = vmatprep.subr.bf16.mxu0 0
        %1027 = vmatpush1.bf16.xpose.msra.mxu0 %v1024
        %1028 = vmatprep.subr.bf16.mxu0 0
        %1029 = vmatpush1.bf16.xpose.msra.mxu0 0
        %1030 = vmatprep.subr.bf16.mxu0 0
        %1031 = vmatpush1.bf16.xpose.msra.mxu0 0
        %1032 = vmatprep.subr.bf16.mxu0 0
        %1033 = vmatpush1.bf16.xpose.msra.mxu0 0
        %1034 = vmatprep.subr.bf16.mxu0 0
        %1035 = vmatpush1.bf16.xpose.msra.mxu0 0
        %1036 = vmatprep.subr.bf16.mxu0 0
        %1037 = vmatpush1.bf16.xpose.msra.mxu0 0
        %1038 = vmatprep.subr.bf16.mxu0 0
        %1039 = vmatpush1.bf16.xpose.msra.mxu0 0
        %1040 = vmatprep.subr.bf16.mxu0 0
        %1041 = vmatpush1.bf16.xpose.msra.mxu0 0
        %1042 = vmatprep.subr.bf16.mxu0 0
        %1043 = vmatpush1.bf16.xpose.msra.mxu0 0
        %1044 = vmatprep.subr.bf16.mxu0 0
        %1045 = vmatpush1.bf16.xpose.msra.mxu0 0
        %1046 = vmatprep.subr.bf16.mxu0 0
        %1047 = vmatpush1.bf16.xpose.msra.mxu0 0
        %1048 = vmatprep.subr.bf16.mxu0 0
        %1049 = vmatpush1.bf16.xpose.msra.mxu0 0
        %1050 = vmatprep.subr.bf16.mxu0 0
        %1051 = vmatpush1.bf16.xpose.msra.mxu0 0
        %1052 = vmatprep.subr.bf16.mxu0 0
        %1053 = vmatpush1.bf16.xpose.msra.mxu0 0
        %1054 = vmatprep.subr.bf16.mxu0 0
        %1055 = vmatpush1.bf16.xpose.msra.mxu0 0
        %1056 = vmatprep.subr.bf16.mxu0 0
        %1057 = vmatpush1.bf16.xpose.msra.mxu0 0
        %1058 = vmatprep.mubr.bf16.mxu0 0
        %1059 = vmatmul.mubr.bf16.gmra.mrb[0].mxu0 %v1021
        %v1060 = vpop.f32.mrb[0].mxu0
        %v1061 = vadd.f32 0.0, %v1060
        %v1062 = vpop.f32.mrb[0].mxu0
        %v1063 = vpop.f32.mrb[0].mxu0
        %v1064 = vpop.f32.mrb[0].mxu0
        %1065 = vdwg.mxu0
        %v1066 = vsel %vm1019, %v1061, -inf
        %1067 = vmax.xlane.f32.xlu0 %v1066
        %v1068 = vpop.xlane.xlu0 %1067
        %v1069 = vsub.f32 %v1061, %v1068
        %v1070 = vmul.f32 %v1069, 1.442695
        %v1071 = vpow.pop %v1070
        %v1072 = vsel %vm1019, %v1071, 0.0
        %1073 = vadd.xlane.f32.xlu0 %v1072
        %v1074 = vpop.xlane.xlu0 %1073
        %v1075 = vrcp.pop %v1074
        %v1076 = vmul.f32 %v1071, %v1075
        %v1077 = vpack.c.bf16 %v1076, %v1076
        %v1078 = vld [vmem:[#allocation3] sm:$0xf]
        %v1080 = vsel %vm1019, %v1077, 0
        %vm1082 = vcmask 1043456
        %v1084 = vsel %vm1082, %v1078, 0
        %1086 = vmatprep.subr.bf16.mxu0 0
        %1087 = vmatpush1.bf16.msra.mxu0 %v1084
        %1088 = vmatprep.subr.bf16.mxu0 0
        %1089 = vmatpush1.bf16.msra.mxu0 0
        %1090 = vmatprep.subr.bf16.mxu0 0
        %1091 = vmatpush1.bf16.msra.mxu0 0
        %1092 = vmatprep.subr.bf16.mxu0 0
        %1093 = vmatpush1.bf16.msra.mxu0 0
        %1094 = vmatprep.subr.bf16.mxu0 0
        %1095 = vmatpush1.bf16.msra.mxu0 0
        %1096 = vmatprep.subr.bf16.mxu0 0
        %1097 = vmatpush1.bf16.msra.mxu0 0
        %1098 = vmatprep.subr.bf16.mxu0 0
        %1099 = vmatpush1.bf16.msra.mxu0 0
        %1100 = vmatprep.subr.bf16.mxu0 0
        %1101 = vmatpush1.bf16.msra.mxu0 0
        %1102 = vmatprep.subr.bf16.mxu0 0
        %1103 = vmatpush1.bf16.msra.mxu0 0
        %1104 = vmatprep.subr.bf16.mxu0 0
        %1105 = vmatpush1.bf16.msra.mxu0 0
        %1106 = vmatprep.subr.bf16.mxu0 0
        %1107 = vmatpush1.bf16.msra.mxu0 0
        %1108 = vmatprep.subr.bf16.mxu0 0
        %1109 = vmatpush1.bf16.msra.mxu0 0
        %1110 = vmatprep.subr.bf16.mxu0 0
        %1111 = vmatpush1.bf16.msra.mxu0 0
        %1112 = vmatprep.subr.bf16.mxu0 0
        %1113 = vmatpush1.bf16.msra.mxu0 0
        %1114 = vmatprep.subr.bf16.mxu0 0
        %1115 = vmatpush1.bf16.msra.mxu0 0
        %1116 = vmatprep.subr.bf16.mxu0 0
        %1117 = vmatpush1.bf16.msra.mxu0 0
        %1118 = vmatprep.mubr.bf16.mxu0 0
        %1119 = vmatmul.mubr.bf16.gmra.mrb[0].mxu0 %v1080
        %v1120 = vpop.f32.mrb[0].mxu0
        %v1121 = vadd.f32 0.0, %v1120
        %v1122 = vpop.f32.mrb[0].mxu0
        %v1123 = vpop.f32.mrb[0].mxu0
        %v1124 = vpop.f32.mrb[0].mxu0
        %1125 = vdwg.mxu0
        %v1126 = vpack.c.bf16 %v1121, %v1121
        %vm1127 = vcmask 60416
        %1128 = vst.msk [vmem:[#allocation5] sm:$0xf] %vm1127, %v1126
        %v1129 = vld [vmem:[#allocation4] sm:$0xf]
        %v1130 = vld [vmem:[#allocation2] sm:$0xf]
        %v1132 = vunpack.c.l.b16 %v1129
        %v1133 = vpack.c.b16 %v1132, %v1132
        %1134 = vrot.lane.b32.xlu0 %v1133, 120
        %v1135 = vpop.permute.xlu0 %1134
        %v1137 = vunpack.c.l.b16 %v1130
        %v1138 = vpack.c.b16 %v1137, %v1137
        %1139 = vrot.lane.b32.xlu0 %v1138, 120
        %v1140 = vpop.permute.xlu0 %1139
        %v1142 = vsel %vm1019, %v1135, 0
        %v1145 = vsel %vm1019, %v1140, 0
        %1147 = vmatprep.subr.bf16.mxu0 0
        %1148 = vmatpush1.bf16.xpose.msra.mxu0 %v1145
        %1149 = vmatprep.subr.bf16.mxu0 0
        %1150 = vmatpush1.bf16.xpose.msra.mxu0 0
        %1151 = vmatprep.subr.bf16.mxu0 0
        %1152 = vmatpush1.bf16.xpose.msra.mxu0 0
        %1153 = vmatprep.subr.bf16.mxu0 0
        %1154 = vmatpush1.bf16.xpose.msra.mxu0 0
        %1155 = vmatprep.subr.bf16.mxu0 0
        %1156 = vmatpush1.bf16.xpose.msra.mxu0 0
        %1157 = vmatprep.subr.bf16.mxu0 0
        %1158 = vmatpush1.bf16.xpose.msra.mxu0 0
        %1159 = vmatprep.subr.bf16.mxu0 0
        %1160 = vmatpush1.bf16.xpose.msra.mxu0 0
        %1161 = vmatprep.subr.bf16.mxu0 0
        %1162 = vmatpush1.bf16.xpose.msra.mxu0 0
        %1163 = vmatprep.subr.bf16.mxu0 0
        %1164 = vmatpush1.bf16.xpose.msra.mxu0 0
        %1165 = vmatprep.subr.bf16.mxu0 0
        %1166 = vmatpush1.bf16.xpose.msra.mxu0 0
        %1167 = vmatprep.subr.bf16.mxu0 0
        %1168 = vmatpush1.bf16.xpose.msra.mxu0 0
        %1169 = vmatprep.subr.bf16.mxu0 0
        %1170 = vmatpush1.bf16.xpose.msra.mxu0 0
        %1171 = vmatprep.subr.bf16.mxu0 0
        %1172 = vmatpush1.bf16.xpose.msra.mxu0 0
        %1173 = vmatprep.subr.bf16.mxu0 0
        %1174 = vmatpush1.bf16.xpose.msra.mxu0 0
        %1175 = vmatprep.subr.bf16.mxu0 0
        %1176 = vmatpush1.bf16.xpose.msra.mxu0 0
        %1177 = vmatprep.subr.bf16.mxu0 0
        %1178 = vmatpush1.bf16.xpose.msra.mxu0 0
        %1179 = vmatprep.mubr.bf16.mxu0 0
        %1180 = vmatmul.mubr.bf16.gmra.mrb[0].mxu0 %v1142
        %v1181 = vpop.f32.mrb[0].mxu0
        %v1182 = vadd.f32 0.0, %v1181
        %v1183 = vpop.f32.mrb[0].mxu0
        %v1184 = vpop.f32.mrb[0].mxu0
        %v1185 = vpop.f32.mrb[0].mxu0
        %1186 = vdwg.mxu0
        %v1187 = vsel %vm1019, %v1182, -inf
        %1188 = vmax.xlane.f32.xlu0 %v1187
        %v1189 = vpop.xlane.xlu0 %1188
        %v1190 = vsub.f32 %v1182, %v1189
        %v1191 = vmul.f32 %v1190, 1.442695
        %v1192 = vpow.pop %v1191
        %v1193 = vsel %vm1019, %v1192, 0.0
        %1194 = vadd.xlane.f32.xlu0 %v1193
        %v1195 = vpop.xlane.xlu0 %1194
        %v1196 = vrcp.pop %v1195
        %v1197 = vmul.f32 %v1192, %v1196
        %v1198 = vpack.c.bf16 %v1197, %v1197
        %v1199 = vld [vmem:[#allocation3] sm:$0xf]
        %v1201 = vunpack.c.l.b16 %v1199
        %v1202 = vpack.c.b16 %v1201, %v1201
        %1203 = vrot.lane.b32.xlu0 %v1202, 120
        %v1204 = vpop.permute.xlu0 %1203
        %v1206 = vsel %vm1019, %v1198, 0
        %v1209 = vsel %vm1082, %v1204, 0
        %1211 = vmatprep.subr.bf16.mxu0 0
        %1212 = vmatpush1.bf16.msra.mxu0 %v1209
        %1213 = vmatprep.subr.bf16.mxu0 0
        %1214 = vmatpush1.bf16.msra.mxu0 0
        %1215 = vmatprep.subr.bf16.mxu0 0
        %1216 = vmatpush1.bf16.msra.mxu0 0
        %1217 = vmatprep.subr.bf16.mxu0 0
        %1218 = vmatpush1.bf16.msra.mxu0 0
        %1219 = vmatprep.subr.bf16.mxu0 0
        %1220 = vmatpush1.bf16.msra.mxu0 0
        %1221 = vmatprep.subr.bf16.mxu0 0
        %1222 = vmatpush1.bf16.msra.mxu0 0
        %1223 = vmatprep.subr.bf16.mxu0 0
        %1224 = vmatpush1.bf16.msra.mxu0 0
        %1225 = vmatprep.subr.bf16.mxu0 0
        %1226 = vmatpush1.bf16.msra.mxu0 0
        %1227 = vmatprep.subr.bf16.mxu0 0
        %1228 = vmatpush1.bf16.msra.mxu0 0
        %1229 = vmatprep.subr.bf16.mxu0 0
        %1230 = vmatpush1.bf16.msra.mxu0 0
        %1231 = vmatprep.subr.bf16.mxu0 0
        %1232 = vmatpush1.bf16.msra.mxu0 0
        %1233 = vmatprep.subr.bf16.mxu0 0
        %1234 = vmatpush1.bf16.msra.mxu0 0
        %1235 = vmatprep.subr.bf16.mxu0 0
        %1236 = vmatpush1.bf16.msra.mxu0 0
        %1237 = vmatprep.subr.bf16.mxu0 0
        %1238 = vmatpush1.bf16.msra.mxu0 0
        %1239 = vmatprep.subr.bf16.mxu0 0
        %1240 = vmatpush1.bf16.msra.mxu0 0
        %1241 = vmatprep.subr.bf16.mxu0 0
        %1242 = vmatpush1.bf16.msra.mxu0 0
        %1243 = vmatprep.mubr.bf16.mxu0 0
        %1244 = vmatmul.mubr.bf16.gmra.mrb[0].mxu0 %v1206
        %v1245 = vpop.f32.mrb[0].mxu0
        %v1246 = vadd.f32 0.0, %v1245
        %v1247 = vpop.f32.mrb[0].mxu0
        %v1248 = vpop.f32.mrb[0].mxu0
        %v1249 = vpop.f32.mrb[0].mxu0
        %1250 = vdwg.mxu0
        %v1251 = vpack.c.bf16 %v1246, %v1246
        %v1253 = vunpack.c.l.b16 %v1251
        %v1254 = vpack.c.b16 %v1253, %v1253
        %1255 = vrot.lane.b32.xlu0 %v1254, 8
        %v1256 = vpop.permute.xlu0 %1255
        %vm1258 = vcmask 126016
        %1259 = vst.msk [vmem:[#allocation5] sm:$0xf] %vm1258, %v1256
        %v1260 = vld [vmem:[#allocation4] sm:$0xf]
        %v1261 = vld [vmem:[#allocation2] sm:$0xf]
        %v1263 = vunpack.c.l.b16 %v1260
        %v1264 = vpack.c.b16 %v1263, %v1263
        %1265 = vrot.lane.b32.xlu0 %v1264, 112
        %v1266 = vpop.permute.xlu0 %1265
        %v1268 = vunpack.c.l.b16 %v1261
        %v1269 = vpack.c.b16 %v1268, %v1268
        %1270 = vrot.lane.b32.xlu0 %v1269, 112
        %v1271 = vpop.permute.xlu0 %1270
        %v1273 = vsel %vm1019, %v1266, 0
        %v1276 = vsel %vm1019, %v1271, 0
        %1278 = vmatprep.subr.bf16.mxu0 0
        %1279 = vmatpush1.bf16.xpose.msra.mxu0 %v1276
        %1280 = vmatprep.subr.bf16.mxu0 0
        %1281 = vmatpush1.bf16.xpose.msra.mxu0 0
        %1282 = vmatprep.subr.bf16.mxu0 0
        %1283 = vmatpush1.bf16.xpose.msra.mxu0 0
        %1284 = vmatprep.subr.bf16.mxu0 0
        %1285 = vmatpush1.bf16.xpose.msra.mxu0 0
        %1286 = vmatprep.subr.bf16.mxu0 0
        %1287 = vmatpush1.bf16.xpose.msra.mxu0 0
        %1288 = vmatprep.subr.bf16.mxu0 0
        %1289 = vmatpush1.bf16.xpose.msra.mxu0 0
        %1290 = vmatprep.subr.bf16.mxu0 0
        %1291 = vmatpush1.bf16.xpose.msra.mxu0 0
        %1292 = vmatprep.subr.bf16.mxu0 0
        %1293 = vmatpush1.bf16.xpose.msra.mxu0 0
        %1294 = vmatprep.subr.bf16.mxu0 0
        %1295 = vmatpush1.bf16.xpose.msra.mxu0 0
        %1296 = vmatprep.subr.bf16.mxu0 0
        %1297 = vmatpush1.bf16.xpose.msra.mxu0 0
        %1298 = vmatprep.subr.bf16.mxu0 0
        %1299 = vmatpush1.bf16.xpose.msra.mxu0 0
        %1300 = vmatprep.subr.bf16.mxu0 0
        %1301 = vmatpush1.bf16.xpose.msra.mxu0 0
        %1302 = vmatprep.subr.bf16.mxu0 0
        %1303 = vmatpush1.bf16.xpose.msra.mxu0 0
        %1304 = vmatprep.subr.bf16.mxu0 0
        %1305 = vmatpush1.bf16.xpose.msra.mxu0 0
        %1306 = vmatprep.subr.bf16.mxu0 0
        %1307 = vmatpush1.bf16.xpose.msra.mxu0 0
        %1308 = vmatprep.subr.bf16.mxu0 0
        %1309 = vmatpush1.bf16.xpose.msra.mxu0 0
        %1310 = vmatprep.mubr.bf16.mxu0 0
        %1311 = vmatmul.mubr.bf16.gmra.mrb[0].mxu0 %v1273
        %v1312 = vpop.f32.mrb[0].mxu0
        %v1313 = vadd.f32 0.0, %v1312
        %v1314 = vpop.f32.mrb[0].mxu0
        %v1315 = vpop.f32.mrb[0].mxu0
        %v1316 = vpop.f32.mrb[0].mxu0
        %1317 = vdwg.mxu0
        %v1318 = vsel %vm1019, %v1313, -inf
        %1319 = vmax.xlane.f32.xlu0 %v1318
        %v1320 = vpop.xlane.xlu0 %1319
        %v1321 = vsub.f32 %v1313, %v1320
        %v1322 = vmul.f32 %v1321, 1.442695
        %v1323 = vpow.pop %v1322
        %v1324 = vsel %vm1019, %v1323, 0.0
        %1325 = vadd.xlane.f32.xlu0 %v1324
        %v1326 = vpop.xlane.xlu0 %1325
        %v1327 = vrcp.pop %v1326
        %v1328 = vmul.f32 %v1323, %v1327
        %v1329 = vpack.c.bf16 %v1328, %v1328
        %v1330 = vld [vmem:[#allocation3] sm:$0xf]
        %v1332 = vunpack.c.l.b16 %v1330
        %v1333 = vpack.c.b16 %v1332, %v1332
        %1334 = vrot.lane.b32.xlu0 %v1333, 112
        %v1335 = vpop.permute.xlu0 %1334
        %v1337 = vsel %vm1019, %v1329, 0
        %v1340 = vsel %vm1082, %v1335, 0
        %1342 = vmatprep.subr.bf16.mxu0 0
        %1343 = vmatpush1.bf16.msra.mxu0 %v1340
        %1344 = vmatprep.subr.bf16.mxu0 0
        %1345 = vmatpush1.bf16.msra.mxu0 0
        %1346 = vmatprep.subr.bf16.mxu0 0
        %1347 = vmatpush1.bf16.msra.mxu0 0
        %1348 = vmatprep.subr.bf16.mxu0 0
        %1349 = vmatpush1.bf16.msra.mxu0 0
        %1350 = vmatprep.subr.bf16.mxu0 0
        %1351 = vmatpush1.bf16.msra.mxu0 0
        %1352 = vmatprep.subr.bf16.mxu0 0
        %1353 = vmatpush1.bf16.msra.mxu0 0
        %1354 = vmatprep.subr.bf16.mxu0 0
        %1355 = vmatpush1.bf16.msra.mxu0 0
        %1356 = vmatprep.subr.bf16.mxu0 0
        %1357 = vmatpush1.bf16.msra.mxu0 0
        %1358 = vmatprep.subr.bf16.mxu0 0
        %1359 = vmatpush1.bf16.msra.mxu0 0
        %1360 = vmatprep.subr.bf16.mxu0 0
        %1361 = vmatpush1.bf16.msra.mxu0 0
        %1362 = vmatprep.subr.bf16.mxu0 0
        %1363 = vmatpush1.bf16.msra.mxu0 0
        %1364 = vmatprep.subr.bf16.mxu0 0
        %1365 = vmatpush1.bf16.msra.mxu0 0
        %1366 = vmatprep.subr.bf16.mxu0 0
        %1367 = vmatpush1.bf16.msra.mxu0 0
        %1368 = vmatprep.subr.bf16.mxu0 0
        %1369 = vmatpush1.bf16.msra.mxu0 0
        %1370 = vmatprep.subr.bf16.mxu0 0
        %1371 = vmatpush1.bf16.msra.mxu0 0
        %1372 = vmatprep.subr.bf16.mxu0 0
        %1373 = vmatpush1.bf16.msra.mxu0 0
        %1374 = vmatprep.mubr.bf16.mxu0 0
        %1375 = vmatmul.mubr.bf16.gmra.mrb[0].mxu0 %v1337
        %v1376 = vpop.f32.mrb[0].mxu0
        %v1377 = vadd.f32 0.0, %v1376
        %v1378 = vpop.f32.mrb[0].mxu0
        %v1379 = vpop.f32.mrb[0].mxu0
        %v1380 = vpop.f32.mrb[0].mxu0
        %1381 = vdwg.mxu0
        %v1382 = vpack.c.bf16 %v1377, %v1377
        %v1384 = vunpack.c.l.b16 %v1382
        %v1385 = vpack.c.b16 %v1384, %v1384
        %1386 = vrot.lane.b32.xlu0 %v1385, 16
        %v1387 = vpop.permute.xlu0 %1386
        %vm1389 = vcmask 191616
        %1390 = vst.msk [vmem:[#allocation5] sm:$0xf] %vm1389, %v1387
        %v1391 = vld [vmem:[#allocation4] sm:$0xf]
        %v1392 = vld [vmem:[#allocation2] sm:$0xf]
        %v1394 = vunpack.c.l.b16 %v1391
        %v1395 = vpack.c.b16 %v1394, %v1394
        %1396 = vrot.lane.b32.xlu0 %v1395, 104
        %v1397 = vpop.permute.xlu0 %1396
        %v1399 = vunpack.c.l.b16 %v1392
        %v1400 = vpack.c.b16 %v1399, %v1399
        %1401 = vrot.lane.b32.xlu0 %v1400, 104
        %v1402 = vpop.permute.xlu0 %1401
        %v1404 = vsel %vm1019, %v1397, 0
        %v1407 = vsel %vm1019, %v1402, 0
        %1409 = vmatprep.subr.bf16.mxu0 0
        %1410 = vmatpush1.bf16.xpose.msra.mxu0 %v1407
        %1411 = vmatprep.subr.bf16.mxu0 0
        %1412 = vmatpush1.bf16.xpose.msra.mxu0 0
        %1413 = vmatprep.subr.bf16.mxu0 0
        %1414 = vmatpush1.bf16.xpose.msra.mxu0 0
        %1415 = vmatprep.subr.bf16.mxu0 0
        %1416 = vmatpush1.bf16.xpose.msra.mxu0 0
        %1417 = vmatprep.subr.bf16.mxu0 0
        %1418 = vmatpush1.bf16.xpose.msra.mxu0 0
        %1419 = vmatprep.subr.bf16.mxu0 0
        %1420 = vmatpush1.bf16.xpose.msra.mxu0 0
        %1421 = vmatprep.subr.bf16.mxu0 0
        %1422 = vmatpush1.bf16.xpose.msra.mxu0 0
        %1423 = vmatprep.subr.bf16.mxu0 0
        %1424 = vmatpush1.bf16.xpose.msra.mxu0 0
        %1425 = vmatprep.subr.bf16.mxu0 0
        %1426 = vmatpush1.bf16.xpose.msra.mxu0 0
        %1427 = vmatprep.subr.bf16.mxu0 0
        %1428 = vmatpush1.bf16.xpose.msra.mxu0 0
        %1429 = vmatprep.subr.bf16.mxu0 0
        %1430 = vmatpush1.bf16.xpose.msra.mxu0 0
        %1431 = vmatprep.subr.bf16.mxu0 0
        %1432 = vmatpush1.bf16.xpose.msra.mxu0 0
        %1433 = vmatprep.subr.bf16.mxu0 0
        %1434 = vmatpush1.bf16.xpose.msra.mxu0 0
        %1435 = vmatprep.subr.bf16.mxu0 0
        %1436 = vmatpush1.bf16.xpose.msra.mxu0 0
        %1437 = vmatprep.subr.bf16.mxu0 0
        %1438 = vmatpush1.bf16.xpose.msra.mxu0 0
        %1439 = vmatprep.subr.bf16.mxu0 0
        %1440 = vmatpush1.bf16.xpose.msra.mxu0 0
        %1441 = vmatprep.mubr.bf16.mxu0 0
        %1442 = vmatmul.mubr.bf16.gmra.mrb[0].mxu0 %v1404
        %v1443 = vpop.f32.mrb[0].mxu0
        %v1444 = vadd.f32 0.0, %v1443
        %v1445 = vpop.f32.mrb[0].mxu0
        %v1446 = vpop.f32.mrb[0].mxu0
        %v1447 = vpop.f32.mrb[0].mxu0
        %1448 = vdwg.mxu0
        %v1449 = vsel %vm1019, %v1444, -inf
        %1450 = vmax.xlane.f32.xlu0 %v1449
        %v1451 = vpop.xlane.xlu0 %1450
        %v1452 = vsub.f32 %v1444, %v1451
        %v1453 = vmul.f32 %v1452, 1.442695
        %v1454 = vpow.pop %v1453
        %v1455 = vsel %vm1019, %v1454, 0.0
        %1456 = vadd.xlane.f32.xlu0 %v1455
        %v1457 = vpop.xlane.xlu0 %1456
        %v1458 = vrcp.pop %v1457
        %v1459 = vmul.f32 %v1454, %v1458
        %v1460 = vpack.c.bf16 %v1459, %v1459
        %v1461 = vld [vmem:[#allocation3] sm:$0xf]
        %v1463 = vunpack.c.l.b16 %v1461
        %v1464 = vpack.c.b16 %v1463, %v1463
        %1465 = vrot.lane.b32.xlu0 %v1464, 104
        %v1466 = vpop.permute.xlu0 %1465
        %v1468 = vsel %vm1019, %v1460, 0
        %v1471 = vsel %vm1082, %v1466, 0
        %1473 = vmatprep.subr.bf16.mxu0 0
        %1474 = vmatpush1.bf16.msra.mxu0 %v1471
        %1475 = vmatprep.subr.bf16.mxu0 0
        %1476 = vmatpush1.bf16.msra.mxu0 0
        %1477 = vmatprep.subr.bf16.mxu0 0
        %1478 = vmatpush1.bf16.msra.mxu0 0
        %1479 = vmatprep.subr.bf16.mxu0 0
        %1480 = vmatpush1.bf16.msra.mxu0 0
        %1481 = vmatprep.subr.bf16.mxu0 0
        %1482 = vmatpush1.bf16.msra.mxu0 0
        %1483 = vmatprep.subr.bf16.mxu0 0
        %1484 = vmatpush1.bf16.msra.mxu0 0
        %1485 = vmatprep.subr.bf16.mxu0 0
        %1486 = vmatpush1.bf16.msra.mxu0 0
        %1487 = vmatprep.subr.bf16.mxu0 0
        %1488 = vmatpush1.bf16.msra.mxu0 0
        %1489 = vmatprep.subr.bf16.mxu0 0
        %1490 = vmatpush1.bf16.msra.mxu0 0
        %1491 = vmatprep.subr.bf16.mxu0 0
        %1492 = vmatpush1.bf16.msra.mxu0 0
        %1493 = vmatprep.subr.bf16.mxu0 0
        %1494 = vmatpush1.bf16.msra.mxu0 0
        %1495 = vmatprep.subr.bf16.mxu0 0
        %1496 = vmatpush1.bf16.msra.mxu0 0
        %1497 = vmatprep.subr.bf16.mxu0 0
        %1498 = vmatpush1.bf16.msra.mxu0 0
        %1499 = vmatprep.subr.bf16.mxu0 0
        %1500 = vmatpush1.bf16.msra.mxu0 0
        %1501 = vmatprep.subr.bf16.mxu0 0
        %1502 = vmatpush1.bf16.msra.mxu0 0
        %1503 = vmatprep.subr.bf16.mxu0 0
        %1504 = vmatpush1.bf16.msra.mxu0 0
        %1505 = vmatprep.mubr.bf16.mxu0 0
        %1506 = vmatmul.mubr.bf16.gmra.mrb[0].mxu0 %v1468
        %v1507 = vpop.f32.mrb[0].mxu0
        %v1508 = vadd.f32 0.0, %v1507
        %v1509 = vpop.f32.mrb[0].mxu0
        %v1510 = vpop.f32.mrb[0].mxu0
        %v1511 = vpop.f32.mrb[0].mxu0
        %1512 = vdwg.mxu0
        %v1513 = vpack.c.bf16 %v1508, %v1508
        %v1515 = vunpack.c.l.b16 %v1513
        %v1516 = vpack.c.b16 %v1515, %v1515
        %1517 = vrot.lane.b32.xlu0 %v1516, 24
        %v1518 = vpop.permute.xlu0 %1517
        %vm1520 = vcmask 257216
        %1521 = vst.msk [vmem:[#allocation5] sm:$0xf] %vm1520, %v1518
        %v1522 = vld [vmem:[#allocation5] sm:$0xf]
        %v1523 = vld [vmem:[%s10] sm:$0xf]
        %v1524 = vld [vmem:[%s10 + $0x4] sm:$0xf]
        %v1525 = vld [vmem:[%s10 + $0x8] sm:$0xf]
        %v1526 = vld [vmem:[%s10 + $0xc] sm:$0xf]
        %v1527 = vld [vmem:[%s11] sm:$0x1]
        %v1529 = vlaneseq
        %v1530 = vshrl.u32 %v1529, 7
        %v1531 = vsub.s32 0, %v1530
        %v1532 = vrot.slane %v1527, %v1531
        %v1538 = vunpack.c.l.b16 %v1523
        %v1539 = vunpack.c.l.b16 %v1524
        %v1540 = vunpack.c.l.b16 %v1525
        %v1541 = vunpack.c.l.b16 %v1526
        %v1542 = vpack.c.b16 %v1539, %v1538
        %v1543 = vpack.c.b16 %v1541, %v1540
        %v1547 = vsel %vm970, %v1522, 0
        %1549 = vmatprep.subr.bf16.mxu0 0
        %1550 = vmatpush1.bf16.msra.mxu0 %v1542
        %1551 = vmatprep.subr.bf16.mxu0 0
        %1552 = vmatpush1.bf16.msra.mxu0 %v1543
        %1553 = vmatprep.subr.bf16.mxu0 0
        %1554 = vmatpush1.bf16.msra.mxu0 0
        %1555 = vmatprep.subr.bf16.mxu0 0
        %1556 = vmatpush1.bf16.msra.mxu0 0
        %1557 = vmatprep.subr.bf16.mxu0 0
        %1558 = vmatpush1.bf16.msra.mxu0 0
        %1559 = vmatprep.subr.bf16.mxu0 0
        %1560 = vmatpush1.bf16.msra.mxu0 0
        %1561 = vmatprep.subr.bf16.mxu0 0
        %1562 = vmatpush1.bf16.msra.mxu0 0
        %1563 = vmatprep.subr.bf16.mxu0 0
        %1564 = vmatpush1.bf16.msra.mxu0 0
        %1565 = vmatprep.subr.bf16.mxu0 0
        %1566 = vmatpush1.bf16.msra.mxu0 0
        %1567 = vmatprep.subr.bf16.mxu0 0
        %1568 = vmatpush1.bf16.msra.mxu0 0
        %1569 = vmatprep.subr.bf16.mxu0 0
        %1570 = vmatpush1.bf16.msra.mxu0 0
        %1571 = vmatprep.subr.bf16.mxu0 0
        %1572 = vmatpush1.bf16.msra.mxu0 0
        %1573 = vmatprep.subr.bf16.mxu0 0
        %1574 = vmatpush1.bf16.msra.mxu0 0
        %1575 = vmatprep.subr.bf16.mxu0 0
        %1576 = vmatpush1.bf16.msra.mxu0 0
        %1577 = vmatprep.subr.bf16.mxu0 0
        %1578 = vmatpush1.bf16.msra.mxu0 0
        %1579 = vmatprep.subr.bf16.mxu0 0
        %1580 = vmatpush1.bf16.msra.mxu0 0
        %1581 = vmatprep.mubr.bf16.mxu0 0
        %1582 = vmatmul.mubr.bf16.gmra.mrb[0].mxu0 %v1547
        %v1583 = vpop.f32.mrb[0].mxu0
        %v1584 = vadd.f32 %v1532, %v1583
        %v1585 = vpop.f32.mrb[0].mxu0
        %v1586 = vpop.f32.mrb[0].mxu0
        %v1587 = vpop.f32.mrb[0].mxu0
        %1588 = vdwg.mxu0
        %v1589 = vadd.f32 %v943, %v1584
        %v1590 = vld [vmem:[%s16] sm:$0x1]
        %v1591 = vld [vmem:[%s17] sm:$0x1]
        %v1592 = vsel %vm970, %v1589, 0.0
        %1593 = vadd.xlane.f32.xlu0 %v1592
        %v1594 = vpop.xlane.xlu0 %1593
        %v1595 = vmul.f32 %v1589, %v1589
        %v1596 = vsel %vm970, %v1595, 0.0
        %1597 = vadd.xlane.f32.xlu0 %v1596
        %v1598 = vpop.xlane.xlu0 %1597
        %v1599 = vmul.f32 %v1594, 0.03125
        %v1600 = vmul.f32 %v1598, 0.03125
        %v1601 = vmul.f32 %v1599, %v1599
        %v1602 = vsub.f32 %v1600, %v1601
        %v1603 = vmax.f32 %v1602, 0.0
        %v1604 = vsub.f32 %v1589, %v1599
        %v1605 = vadd.f32 %v1603, 1e-05
        %v1606 = vrsqrt.pop %v1605
        %v1607 = vmul.f32 %v1604, %v1606
        %v1609 = vlaneseq
        %v1610 = vshrl.u32 %v1609, 7
        %v1611 = vsub.s32 0, %v1610
        %v1612 = vrot.slane %v1590, %v1611
        %v1614 = vmul.f32 %v1607, %v1612
        %v1616 = vlaneseq
        %v1617 = vshrl.u32 %v1616, 7
        %v1618 = vsub.s32 0, %v1617
        %v1619 = vrot.slane %v1591, %v1618
        %v1621 = vadd.f32 %v1614, %v1619
        %v1622 = vpack.c.bf16 %v1621, %v1621
        %v1623 = vld [vmem:[#allocation15] sm:$0xf]
        %v1624 = vld [vmem:[#allocation15 + $0x4] sm:$0xf]
        %v1625 = vld [vmem:[#allocation15 + $0x8] sm:$0xf]
        %v1626 = vld [vmem:[#allocation15 + $0xc] sm:$0xf]
        %v1627 = vld [vmem:[%s13] sm:$0x1]
        %v1629 = vlaneseq
        %v1630 = vshrl.u32 %v1629, 7
        %v1631 = vsub.s32 0, %v1630
        %v1632 = vrot.slane %v1627, %v1631
        %v1638 = vunpack.c.l.b16 %v1623
        %v1639 = vunpack.c.l.b16 %v1624
        %v1640 = vunpack.c.l.b16 %v1625
        %v1641 = vunpack.c.l.b16 %v1626
        %v1642 = vpack.c.b16 %v1639, %v1638
        %v1643 = vpack.c.b16 %v1641, %v1640
        %v1647 = vsel %vm970, %v1622, 0
        %1649 = vmatprep.subr.bf16.mxu0 0
        %1650 = vmatpush1.bf16.msra.mxu0 %v1642
        %1651 = vmatprep.subr.bf16.mxu0 0
        %1652 = vmatpush1.bf16.msra.mxu0 %v1643
        %1653 = vmatprep.subr.bf16.mxu0 0
        %1654 = vmatpush1.bf16.msra.mxu0 0
        %1655 = vmatprep.subr.bf16.mxu0 0
        %1656 = vmatpush1.bf16.msra.mxu0 0
        %1657 = vmatprep.subr.bf16.mxu0 0
        %1658 = vmatpush1.bf16.msra.mxu0 0
        %1659 = vmatprep.subr.bf16.mxu0 0
        %1660 = vmatpush1.bf16.msra.mxu0 0
        %1661 = vmatprep.subr.bf16.mxu0 0
        %1662 = vmatpush1.bf16.msra.mxu0 0
        %1663 = vmatprep.subr.bf16.mxu0 0
        %1664 = vmatpush1.bf16.msra.mxu0 0
        %1665 = vmatprep.subr.bf16.mxu0 0
        %1666 = vmatpush1.bf16.msra.mxu0 0
        %1667 = vmatprep.subr.bf16.mxu0 0
        %1668 = vmatpush1.bf16.msra.mxu0 0
        %1669 = vmatprep.subr.bf16.mxu0 0
        %1670 = vmatpush1.bf16.msra.mxu0 0
        %1671 = vmatprep.subr.bf16.mxu0 0
        %1672 = vmatpush1.bf16.msra.mxu0 0
        %1673 = vmatprep.subr.bf16.mxu0 0
        %1674 = vmatpush1.bf16.msra.mxu0 0
        %1675 = vmatprep.subr.bf16.mxu0 0
        %1676 = vmatpush1.bf16.msra.mxu0 0
        %1677 = vmatprep.subr.bf16.mxu0 0
        %1678 = vmatpush1.bf16.msra.mxu0 0
        %1679 = vmatprep.subr.bf16.mxu0 0
        %1680 = vmatpush1.bf16.msra.mxu0 0
        %1681 = vmatprep.mubr.bf16.mxu0 0
        %1682 = vmatmul.mubr.bf16.gmra.mrb[0].mxu0 %v1647
        %v1683 = vpop.f32.mrb[0].mxu0
        %v1684 = vadd.f32 %v1632, %v1683
        %v1685 = vpop.f32.mrb[0].mxu0
        %v1686 = vpop.f32.mrb[0].mxu0
        %v1687 = vpop.f32.mrb[0].mxu0
        %1688 = vdwg.mxu0
        %v1689 = vmax.f32 %v1684, 0.0
        %v1690 = vpack.c.bf16 %v1689, %v1689
        %v1691 = vld [vmem:[%s14] sm:$0xf]
        %v1692 = vld [vmem:[%s14 + $0x4] sm:$0xf]
        %v1693 = vld [vmem:[%s14 + $0x8] sm:$0xf]
        %v1694 = vld [vmem:[%s14 + $0xc] sm:$0xf]
        %v1695 = vld [vmem:[%s14 + $0x10] sm:$0xf]
        %v1696 = vld [vmem:[%s14 + $0x14] sm:$0xf]
        %v1697 = vld [vmem:[%s14 + $0x18] sm:$0xf]
        %v1698 = vld [vmem:[%s14 + $0x1c] sm:$0xf]
        %v1707 = vunpack.c.l.b16 %v1691
        %v1708 = vunpack.c.l.b16 %v1692
        %v1709 = vunpack.c.l.b16 %v1693
        %v1710 = vunpack.c.l.b16 %v1694
        %v1711 = vunpack.c.l.b16 %v1695
        %v1712 = vunpack.c.l.b16 %v1696
        %v1713 = vunpack.c.l.b16 %v1697
        %v1714 = vunpack.c.l.b16 %v1698
        %v1715 = vpack.c.b16 %v1708, %v1707
        %v1716 = vpack.c.b16 %v1710, %v1709
        %v1717 = vpack.c.b16 %v1712, %v1711
        %v1718 = vpack.c.b16 %v1714, %v1713
        %vm1723 = vcmask 523264
        %v1725 = vsel %vm1723, %v1690, 0
        %1727 = vmatprep.subr.bf16.mxu0 0
        %1728 = vmatpush1.bf16.msra.mxu0 %v1715
        %1729 = vmatprep.subr.bf16.mxu0 0
        %1730 = vmatpush1.bf16.msra.mxu0 %v1716
        %1731 = vmatprep.subr.bf16.mxu0 0
        %1732 = vmatpush1.bf16.msra.mxu0 %v1717
        %1733 = vmatprep.subr.bf16.mxu0 0
        %1734 = vmatpush1.bf16.msra.mxu0 %v1718
        %1735 = vmatprep.subr.bf16.mxu0 0
        %1736 = vmatpush1.bf16.msra.mxu0 0
        %1737 = vmatprep.subr.bf16.mxu0 0
        %1738 = vmatpush1.bf16.msra.mxu0 0
        %1739 = vmatprep.subr.bf16.mxu0 0
        %1740 = vmatpush1.bf16.msra.mxu0 0
        %1741 = vmatprep.subr.bf16.mxu0 0
        %1742 = vmatpush1.bf16.msra.mxu0 0
        %1743 = vmatprep.subr.bf16.mxu0 0
        %1744 = vmatpush1.bf16.msra.mxu0 0
        %1745 = vmatprep.subr.bf16.mxu0 0
        %1746 = vmatpush1.bf16.msra.mxu0 0
        %1747 = vmatprep.subr.bf16.mxu0 0
        %1748 = vmatpush1.bf16.msra.mxu0 0
        %1749 = vmatprep.subr.bf16.mxu0 0
        %1750 = vmatpush1.bf16.msra.mxu0 0
        %1751 = vmatprep.subr.bf16.mxu0 0
        %1752 = vmatpush1.bf16.msra.mxu0 0
        %1753 = vmatprep.subr.bf16.mxu0 0
        %1754 = vmatpush1.bf16.msra.mxu0 0
        %1755 = vmatprep.subr.bf16.mxu0 0
        %1756 = vmatpush1.bf16.msra.mxu0 0
        %1757 = vmatprep.subr.bf16.mxu0 0
        %1758 = vmatpush1.bf16.msra.mxu0 0
        %1759 = vmatprep.mubr.bf16.mxu0 0
        %1760 = vmatmul.mubr.bf16.gmra.mrb[0].mxu0 %v1725
        %v1761 = vpop.f32.mrb[0].mxu0
        %v1762 = vadd.f32 0.0, %v1761
        %v1763 = vpop.f32.mrb[0].mxu0
        %v1764 = vpop.f32.mrb[0].mxu0
        %v1765 = vpop.f32.mrb[0].mxu0
        %1766 = vdwg.mxu0
        %v1767 = vadd.f32 %v1621, %v1762
        %v1768 = vld [vmem:[%s15] sm:$0x1]
        %v1770 = vlaneseq
        %v1771 = vshrl.u32 %v1770, 7
        %v1772 = vsub.s32 0, %v1771
        %v1773 = vrot.slane %v1768, %v1772
        %v1775 = vadd.f32 %v1767, %v1773
        %v1776 = vld [vmem:[%s18] sm:$0x1]
        %v1777 = vld [vmem:[%s19] sm:$0x1]
        %v1778 = vsel %vm970, %v1775, 0.0
        %1779 = vadd.xlane.f32.xlu0 %v1778
        %v1780 = vpop.xlane.xlu0 %1779
        %v1781 = vmul.f32 %v1775, %v1775
        %v1782 = vsel %vm970, %v1781, 0.0
        %1783 = vadd.xlane.f32.xlu0 %v1782
        %v1784 = vpop.xlane.xlu0 %1783
        %v1785 = vmul.f32 %v1780, 0.03125
        %v1786 = vmul.f32 %v1784, 0.03125
        %v1787 = vmul.f32 %v1785, %v1785
        %v1788 = vsub.f32 %v1786, %v1787
        %v1789 = vmax.f32 %v1788, 0.0
        %v1790 = vsub.f32 %v1775, %v1785
        %v1791 = vadd.f32 %v1789, 1e-05
        %v1792 = vrsqrt.pop %v1791
        %v1793 = vmul.f32 %v1790, %v1792
        %v1795 = vlaneseq
        %v1796 = vshrl.u32 %v1795, 7
        %v1797 = vsub.s32 0, %v1796
        %v1798 = vrot.slane %v1776, %v1797
        %v1800 = vmul.f32 %v1793, %v1798
        %v1802 = vlaneseq
        %v1803 = vshrl.u32 %v1802, 7
        %v1804 = vsub.s32 0, %v1803
        %v1805 = vrot.slane %v1777, %v1804
        %v1807 = vadd.f32 %v1800, %v1805
        %1808 = vst.msk [vmem:[%s779] sm:$0xff] %vm970, %v1807
        %s1809 = sand.u32 %s506, 1
        %s1810 = scalar_lea.sflag [#allocation8], %s1809
        %s1811 = sand.u32 %s506, 1
        %s1812 = smul.addr %s1811, 8
        %s1813 = scalar_lea.vmem [#allocation17], %s1812
        // Predicated region
        $region129: #{tpu_custom_call.1} parent=99 // pred_check
          %p1814 = pneg %p516
        $region130: #{tpu_custom_call.1} parent=99 // pred_check_branch
          %1816 = sbr.rel (%p1814) target = $region132
        $region131: #{tpu_custom_call.1} parent=99 // pred_region
          %s1818 = ssub.s32 128, 128
          %1819 = vsyncadd %s1810, %s1818
          %s1820 = sadd.s32 %s45, %s44
          %s1821 = smul.addr %s1820, 128
          %s1822 = scalar_lea.hbm %s20, %s1821
          %s1824 = sshll.u32 %s1813, 4
          %s1825 = int_to_ptr.vmem [resolvable:$true] %s1824
          %1827 = dma.vmem_to_hbm [thread:$0]  %s1825, 128, %s1822, %s1810
        $region132: #{tpu_custom_call.1} parent=99 // pred_fallthru
          _
      $region100: #{tpu_custom_call.1} parent=5 // pred_fallthru
        _
      %p1828 = scmp.le.s32.totalorder 2, %s35
      // Predicated region
      $region133: #{tpu_custom_call.1} parent=5 // pred_check
        %p1829 = pneg %p1828
      $region134: #{tpu_custom_call.1} parent=5 // pred_check_branch
        %1831 = sbr.rel (%p1829) target = $region136
      $region135: #{tpu_custom_call.1} parent=5 // pred_region
        %s1832 = ssub.s32 %s35, 2
        // Predicated region
        $region137: #{tpu_custom_call.1} parent=135 // pred_check
          %p1833 = pneg %p522
        $region138: #{tpu_custom_call.1} parent=135 // pred_check_branch
          %1835 = sbr.rel (%p1833) target = $region140
        $region139: #{tpu_custom_call.1} parent=135 // pred_region
          %s1836 = sand.u32 %s507, 1
          %s1837 = scalar_lea.sflag [#allocation8], %s1836
          %s1838 = sand.u32 %s507, 1
          %s1839 = smul.addr %s1838, 8
          %s1840 = scalar_lea.vmem [#allocation17], %s1839
          %1841 = dma.done %s1837, 128
        $region140: #{tpu_custom_call.1} parent=135 // pred_fallthru
          _
      $region136: #{tpu_custom_call.1} parent=5 // pred_fallthru
        _
    $region6: #{tpu_custom_call.1} parent=1 // loop_footer
      %s39 = sadd.s32 1, %s35
    $region7: #{tpu_custom_call.1} parent=1 // loop_footer_branch
      %34 = sbr.rel target = $region3
    $region8: #{tpu_custom_call.1} parent=1 // loop_exit
      _
    %1842 = vsyncpa [#allocation7], 1
    %s1843 = scalar_lea.sflag [#allocation7], 1
    %1844 = vsyncpa %s1843, 1
    %1845 = vsyncpa [#allocation10], 1
    %1846 = vsyncpa [#allocation13], 1
    %1847 = vsyncpa [#allocation16], 1
    %1848 = vsyncpa [#allocation8], 1
    %s1849 = scalar_lea.sflag [#allocation8], 1
    %1850 = vsyncpa %s1849, 1

</llo_original>
